<compile_context>
chip_gen: v6e
topology: v6e:2x2x1
jax: 0.10.0
libtpu: 0.0.40
codegen_flags: <defaults>
</compile_context>

<pallas_src>
import math

import jax
import jax.numpy as jnp
from jax.experimental import pallas as pl
from jax.experimental.pallas import tpu as pltpu


def _round_up(x, m):
    return ((x + m - 1) // m) * m


# ------------------------------------------------------------------
# Pallas kernel 1: fused matmul + BN scale/shift + residual + activation.
# Grid = (nm, nn, nk); A:(tm,tk) bf16, B:(tk,tn) bf16, SB:(2,tn) f32,
# optional R:(tm,tn) bf16, O:(tm,tn) out_dtype.
# nk == 1 (the common case here): single dot + fused epilogue, no scratch.
# nk > 1: f32 VMEM accumulator, epilogue on the last k step.
# ------------------------------------------------------------------
def _make_matmul_kernel(nk, act, has_res, use_acc):
    def kernel(*refs):
        a_ref, b_ref, sb_ref = refs[0], refs[1], refs[2]
        pos = 3
        r_ref = None
        if has_res:
            r_ref = refs[pos]
            pos += 1
        o_ref = refs[pos]
        acc_ref = refs[pos + 1] if use_acc else None

        def epilogue(acc):
            sb = sb_ref[...]
            y = acc * sb[0:1, :] + sb[1:2, :]
            if has_res:
                y = y + r_ref[...].astype(jnp.float32)
            if act == "relu":
                y = jnp.maximum(y, 0.0)
            elif act == "sigmoid":
                y = jax.nn.sigmoid(y)
            o_ref[...] = y.astype(o_ref.dtype)

        if not use_acc:
            epilogue(jnp.dot(a_ref[...], b_ref[...],
                             preferred_element_type=jnp.float32))
        else:
            k = pl.program_id(2)

            @pl.when(k == 0)
            def _():
                acc_ref[...] = jnp.zeros_like(acc_ref)

            acc_ref[...] += jnp.dot(a_ref[...], b_ref[...],
                                    preferred_element_type=jnp.float32)

            @pl.when(k == nk - 1)
            def _():
                epilogue(acc_ref[...])

    return kernel


def matmul_scale_bias_act(a, b, scale, bias, residual=None, act="none",
                          out_dtype=jnp.float32, keep_padded_n=False):
    """out = act((a @ b) * scale + bias [+ residual]); a:(M,K) b:(K,N)."""
    M, K = a.shape
    K2, N = b.shape
    assert K == K2
    has_res = residual is not None
    out_bytes = jnp.dtype(out_dtype).itemsize

    # --- M tiling (multiple of 16 for bf16 sublane packing) ---
    if M > 512:
        tm = 512
        Mp = _round_up(M, tm)
    else:
        Mp = _round_up(M, 16)
        tm = Mp
    nm = Mp // tm

    # --- N tiling: lane-dense 128-multiple tiles, tn <= 512 ---
    Np = _round_up(N, 128)
    tn = Np if Np <= 512 else 512
    nn = Np // tn

    # --- K: whole-K single step when it fits the VMEM budget ---
    Kp = _round_up(K, 128)

    def vmem_bytes(tk_, nk_):
        return (tm * tk_ * 2 * 2                       # A (bf16, double buf)
                + tk_ * tn * 2 * 2                     # B (bf16, double buf)
                + 2 * tn * 4 * 2                       # scale/bias
                + (tm * tn * 2 * 2 if has_res else 0)  # residual (bf16)
                + tm * tn * out_bytes * 2              # output
                + (tm * tn * 4 if nk_ > 1 else 0))     # f32 accumulator

    VMEM_BUDGET = 24 * 1024 * 1024   # conservative so a v6e plan fits v7x
    if vmem_bytes(Kp, 1) <= VMEM_BUDGET:
        tk = Kp
    else:
        tk = 128
        for cand in (512, 256):
            if Kp % cand == 0:
                tk = cand
                break
    nk = Kp // tk
    use_acc = nk > 1

    def maybe_pad2d(x, rows, cols, dtype):
        x = x.astype(dtype)
        if x.shape != (rows, cols):
            x = jnp.pad(x, ((0, rows - x.shape[0]), (0, cols - x.shape[1])))
        return x

    a_p = maybe_pad2d(a, Mp, Kp, jnp.bfloat16)
    b_p = maybe_pad2d(b, Kp, Np, jnp.bfloat16)
    scale_p = scale.astype(jnp.float32)
    bias_p = bias.astype(jnp.float32)
    if Np != N:
        scale_p = jnp.pad(scale_p, (0, Np - N))
        bias_p = jnp.pad(bias_p, (0, Np - N))
    sb_p = jnp.stack([scale_p, bias_p], axis=0)

    in_specs = [
        pl.BlockSpec((tm, tk), lambda i, j, k: (i, k)),   # A
        pl.BlockSpec((tk, tn), lambda i, j, k: (k, j)),   # B (weights)
        pl.BlockSpec((2, tn), lambda i, j, k: (0, j)),    # packed scale/bias
    ]
    inputs = [a_p, b_p, sb_p]
    if has_res:
        r_p = maybe_pad2d(residual, Mp, Np, jnp.bfloat16)
        in_specs.append(pl.BlockSpec((tm, tn), lambda i, j, k: (i, j)))
        inputs.append(r_p)

    scratch = (pltpu.VMEM((tm, tn), jnp.float32),) if use_acc else ()
    vmem_limit = int(min(max(2 * vmem_bytes(tk, nk), 32 * 1024 * 1024),
                         48 * 1024 * 1024))

    out = pl.pallas_call(
        _make_matmul_kernel(nk, act, has_res, use_acc),
        out_shape=jax.ShapeDtypeStruct((Mp, Np), out_dtype),
        grid_spec=pltpu.PrefetchScalarGridSpec(
            num_scalar_prefetch=0,
            grid=(nm, nn, nk),
            in_specs=in_specs,
            out_specs=pl.BlockSpec((tm, tn), lambda i, j, k: (i, j)),
            scratch_shapes=scratch),
        compiler_params=pltpu.CompilerParams(
            dimension_semantics=("parallel", "parallel", "arbitrary"),
            vmem_limit_bytes=vmem_limit),
    )(*inputs)

    if keep_padded_n:
        return out if Mp == M else out[:M, :]
    return out[:M, :N]


# ------------------------------------------------------------------
# Pallas kernel 2: 3x3 / stride-2 / pad-1 max pooling (row-tiled reduce)
# ------------------------------------------------------------------
def _maxpool_kernel(x_ref, o_ref):
    o_ref[...] = jnp.max(x_ref[...], axis=0)


def maxpool_3x3_s2_p1(x):
    B, H, W, C = x.shape
    Ho = (H + 2 - 3) // 2 + 1
    Wo = (W + 2 - 3) // 2 + 1
    xp = jnp.pad(x, ((0, 0), (1, 1), (1, 1), (0, 0)),
                 constant_values=-jnp.inf)
    wins = []
    for dy in range(3):
        for dx in range(3):
            wins.append(xp[:, dy:dy + 2 * (Ho - 1) + 1:2,
                           dx:dx + 2 * (Wo - 1) + 1:2, :])
    R = B * Ho * Wo
    stacked = jnp.stack(wins, axis=0).reshape(9, R, C)

    tr = 512 if R >= 512 else _round_up(R, 16)
    Rp = _round_up(R, tr)
    Cp = _round_up(C, 128)
    if (Rp, Cp) != (R, C):
        stacked = jnp.pad(stacked, ((0, 0), (0, Rp - R), (0, Cp - C)))

    out = pl.pallas_call(
        _maxpool_kernel,
        out_shape=jax.ShapeDtypeStruct((Rp, Cp), x.dtype),
        grid=(Rp // tr,),
        in_specs=[pl.BlockSpec((9, tr, Cp), lambda i: (0, i, 0))],
        out_specs=pl.BlockSpec((tr, Cp), lambda i: (i, 0)),
        compiler_params=pltpu.CompilerParams(
            dimension_semantics=("parallel",)),
    )(stacked)
    return out[:R, :C].reshape(B, Ho, Wo, C)


# ------------------------------------------------------------------
# Pallas kernel 3: global average pooling (AdaptiveAvgPool2d((1,1)))
# ------------------------------------------------------------------
def global_avgpool(x):
    B, H, W, C = x.shape
    HW = H * W
    Cp = _round_up(C, 128)
    x3 = x.reshape(B, HW, C)
    if Cp != C:
        x3 = jnp.pad(x3, ((0, 0), (0, 0), (0, Cp - C)))
    inv_hw = 1.0 / float(HW)

    def kernel(x_ref, o_ref):
        o_ref[...] = jnp.sum(x_ref[...].astype(jnp.float32), axis=1) * inv_hw

    out = pl.pallas_call(
        kernel,
        out_shape=jax.ShapeDtypeStruct((B, Cp), jnp.float32),
        grid=(1,),
        in_specs=[pl.BlockSpec((B, HW, Cp), lambda i: (0, 0, 0))],
        out_specs=pl.BlockSpec((B, Cp), lambda i: (0, 0)),
    )(x3)
    return out[:, :C]


# ------------------------------------------------------------------
# Glue: conv = bf16 im2col (built at padded K) + Pallas fused matmul
# ------------------------------------------------------------------
def _fold_bn(bn, eps=1e-5):
    scale = bn["gamma"] / jnp.sqrt(bn["var"] + eps)
    shift = bn["beta"] - bn["mean"] * scale
    return scale, shift


def conv2d_bn_act(x, w, bn, stride, padding, act="none", residual=None):
    """x: NHWC bf16 with channels zero-padded so x.shape[-1] >= w.shape[1];
    w: OIHW (PyTorch).  Returns NHWC bf16 with Cout zero-padded to a multiple
    of 128 (padded channels are exactly zero -> safe to carry downstream)."""
    B, H, W, Cin_pad = x.shape
    Cout, Cin, kh, kw = w.shape
    assert Cin_pad >= Cin
    Ho = (H + 2 * padding - kh) // stride + 1
    Wo = (W + 2 * padding - kw) // stride + 1

    xb = x if x.dtype == jnp.bfloat16 else x.astype(jnp.bfloat16)
    if padding > 0:
        xb = jnp.pad(xb, ((0, 0), (padding, padding), (padding, padding), (0, 0)))

    # TODO(synk): replace im2col with a kh*kw-step shifted-matmul reduction
    # (direct strided reads of the padded NHWC tensor accumulating into the
    # resident output block) to remove the kh*kw activation inflation in HBM.
    cols = []
    for dy in range(kh):
        for dx in range(kw):
            cols.append(xb[:, dy:dy + stride * (Ho - 1) + 1:stride,
                           dx:dx + stride * (Wo - 1) + 1:stride, :])
    K = kh * kw * Cin_pad
    Kp = _round_up(K, 128)
    if Kp != K:   # only conv1 (Cin=3); build the padded im2col buffer directly
        cols.append(jnp.zeros((B, Ho, Wo, Kp - K), jnp.bfloat16))
    a = jnp.concatenate(cols, axis=-1).reshape(B * Ho * Wo, Kp)

    wt = jnp.transpose(w, (2, 3, 1, 0))                 # (kh, kw, Cin, Cout)
    if Cin_pad != Cin:
        wt = jnp.pad(wt, ((0, 0), (0, 0), (0, Cin_pad - Cin), (0, 0)))
    wm = wt.reshape(K, Cout)
    if Kp != K:
        wm = jnp.pad(wm, ((0, Kp - K), (0, 0)))
    wm = wm.astype(jnp.bfloat16)

    scale, shift = _fold_bn(bn)
    res = None
    if residual is not None:
        res = residual.reshape(B * Ho * Wo, residual.shape[-1])
    y = matmul_scale_bias_act(a, wm, scale, shift, residual=res, act=act,
                              out_dtype=jnp.bfloat16, keep_padded_n=True)
    Cout_pad = _round_up(Cout, 128)
    return y.reshape(B, Ho, Wo, Cout_pad)


def bottleneck_forward(x, blk):
    stride = blk["stride"]
    if "downsample" in blk:
        identity = conv2d_bn_act(x, blk["downsample"]["conv"],
                                 blk["downsample"]["bn"],
                                 stride=stride, padding=0, act="none")
    else:
        identity = x
    out = conv2d_bn_act(x, blk["conv1"], blk["bn1"], stride=1, padding=0, act="relu")
    out = conv2d_bn_act(out, blk["conv2"], blk["bn2"], stride=stride, padding=1, act="relu")
    # residual add + final ReLU fused into the conv3 matmul epilogue
    out = conv2d_bn_act(out, blk["conv3"], blk["bn3"], stride=1, padding=0,
                        act="relu", residual=identity)
    return out


# ------------------------------------------------------------------
# Deterministic synthetic ResNet-50 parameters (eval-mode BN statistics)
# ------------------------------------------------------------------
class _Init:
    def __init__(self, seed):
        self._key = jax.random.PRNGKey(seed)

    def _next(self):
        self._key, sub = jax.random.split(self._key)
        return sub

    def conv(self, cout, cin, kh, kw):
        fan_in = cin * kh * kw
        return (jax.random.normal(self._next(), (cout, cin, kh, kw), jnp.float32)
                * math.sqrt(2.0 / fan_in))

    def bn(self, c):
        return {
            "gamma": 1.0 + 0.1 * jax.random.normal(self._next(), (c,), jnp.float32),
            "beta": 0.1 * jax.random.normal(self._next(), (c,), jnp.float32),
            "mean": 0.1 * jax.random.normal(self._next(), (c,), jnp.float32),
            "var": jax.random.uniform(self._next(), (c,), jnp.float32, 0.5, 1.5),
        }

    def linear(self, cout, cin):
        w = (jax.random.normal(self._next(), (cout, cin), jnp.float32)
             * math.sqrt(1.0 / cin))
        b = 0.1 * jax.random.normal(self._next(), (cout,), jnp.float32)
        return {"weight": w, "bias": b}


def make_resnet50_params(seed=0, num_classes=5):
    init = _Init(seed)
    params = {"conv1": init.conv(64, 3, 7, 7), "bn1": init.bn(64)}
    inplanes = 64
    layers = []
    for planes, nblocks, stride in [(64, 3, 1), (128, 4, 2), (256, 6, 2), (512, 3, 2)]:
        blocks = []
        for b in range(nblocks):
            s = stride if b == 0 else 1
            blk = {
                "conv1": init.conv(planes, inplanes, 1, 1), "bn1": init.bn(planes),
                "conv2": init.conv(planes, planes, 3, 3), "bn2": init.bn(planes),
                "conv3": init.conv(planes * 4, planes, 1, 1), "bn3": init.bn(planes * 4),
                "stride": s,
            }
            if s != 1 or inplanes != planes * 4:
                blk["downsample"] = {"conv": init.conv(planes * 4, inplanes, 1, 1),
                                     "bn": init.bn(planes * 4)}
            blocks.append(blk)
            inplanes = planes * 4
        layers.append(blocks)
    params["layers"] = layers
    params["fc"] = init.linear(num_classes, 512 * 4)
    return params


# ------------------------------------------------------------------
# Full forward pass (mirrors ResNet50_Noa_Karen.forward)
# ------------------------------------------------------------------
def resnet50_noa_karen_forward(params, x_nchw):
    x = jnp.transpose(x_nchw, (0, 2, 3, 1)).astype(jnp.bfloat16)   # NCHW -> NHWC
    x = conv2d_bn_act(x, params["conv1"], params["bn1"],
                      stride=2, padding=3, act="relu")             # conv1+bn1+relu
    x = maxpool_3x3_s2_p1(x)                                       # maxpool
    for blocks in params["layers"]:                                # layer1..layer4
        for blk in blocks:
            x = bottleneck_forward(x, blk)
    x = global_avgpool(x)                                          # avgpool + flatten
    fc = params["fc"]
    x = x[:, :fc["weight"].shape[1]]
    ones = jnp.ones((fc["weight"].shape[0],), jnp.float32)
    out = matmul_scale_bias_act(x, fc["weight"].T, ones, fc["bias"],
                                act="sigmoid", out_dtype=jnp.float32)  # fc + sigmoid
    return out


if __name__ == "__main__":
    x = jax.random.normal(jax.random.PRNGKey(0), (2, 3, 64, 64), jnp.float32)
    params = make_resnet50_params(seed=1, num_classes=5)
    out = resnet50_noa_karen_forward(params, x)
    out = jax.block_until_ready(out)
    assert out.shape == (2, 5), out.shape
    assert bool(jnp.all(jnp.isfinite(out)))
    assert bool(jnp.all((out >= 0.0) & (out <= 1.0)))
    print("KERNEL_OK")
</pallas_src>

<mosaic_0001>
module attributes {stable_mosaic.version = 11 : i64} {
  func.func @kernel(%arg0: i32, %arg1: i32, %arg2: i32, %arg3: memref<512x256xbf16, #tpu.memory_space<vmem>>, %arg4: memref<256x128xbf16, #tpu.memory_space<vmem>>, %arg5: memref<2x128xf32, #tpu.memory_space<vmem>>, %arg6: memref<512x128xbf16, #tpu.memory_space<vmem>>) attributes {dimension_semantics = [#tpu.dimension_semantics<parallel>, #tpu.dimension_semantics<parallel>, #tpu.dimension_semantics<arbitrary>], iteration_bounds = array<i64: 4, 1, 1>, scalar_prefetch = 0 : i64, scratch_operands = 0 : i64, tpu.core_type = #tpu.core_type<tc>, window_params = [{transform_indices = @transform_0, window_bounds = array<i64: 512, 256>}, {transform_indices = @transform_1, window_bounds = array<i64: 256, 128>}, {transform_indices = @transform_2, window_bounds = array<i64: 2, 128>}, {transform_indices = @transform_3, window_bounds = array<i64: 512, 128>}]} {
    %c0 = arith.constant 0 : index
    %c0_0 = arith.constant 0 : index
    %0 = vector.load %arg3[%c0, %c0_0] : memref<512x256xbf16, #tpu.memory_space<vmem>>, vector<512x256xbf16>
    %c0_1 = arith.constant 0 : index
    %c0_2 = arith.constant 0 : index
    %1 = vector.load %arg4[%c0_1, %c0_2] : memref<256x128xbf16, #tpu.memory_space<vmem>>, vector<256x128xbf16>
    %cst = arith.constant dense<0.000000e+00> : vector<512x128xf32>
    %2 = tpu.matmul %0, %1, %cst {dimension_numbers = #tpu.dot_dimension_numbers<[1], [0], [0], [1], [0, 0, 1, 1], [], []>} : vector<512x256xbf16>, vector<256x128xbf16>, vector<512x128xf32> -> vector<512x128xf32>
    %c0_3 = arith.constant 0 : index
    %c0_4 = arith.constant 0 : index
    %3 = vector.load %arg5[%c0_3, %c0_4] : memref<2x128xf32, #tpu.memory_space<vmem>>, vector<2x128xf32>
    %4 = vector.extract_strided_slice %3 {offsets = [0, 0], sizes = [1, 128], strides = [1, 1]} : vector<2x128xf32> to vector<1x128xf32>
    %5 = vector.broadcast %4 : vector<1x128xf32> to vector<512x128xf32>
    %6 = arith.mulf %2, %5 : vector<512x128xf32>
    %7 = vector.extract_strided_slice %3 {offsets = [1, 0], sizes = [1, 128], strides = [1, 1]} : vector<2x128xf32> to vector<1x128xf32>
    %8 = vector.broadcast %7 : vector<1x128xf32> to vector<512x128xf32>
    %9 = arith.addf %6, %8 : vector<512x128xf32>
    %cst_5 = arith.constant 0.000000e+00 : f32
    %10 = vector.broadcast %cst_5 : f32 to vector<512x128xf32>
    %11 = arith.maximumf %9, %10 : vector<512x128xf32>
    %12 = arith.truncf %11 : vector<512x128xf32> to vector<512x128xbf16>
    %c0_6 = arith.constant 0 : index
    %c0_7 = arith.constant 0 : index
    %13 = vector.load %arg6[%c0_6, %c0_7] : memref<512x128xbf16, #tpu.memory_space<vmem>>, vector<512x128xbf16>
    tpu.vector_store %arg6[%c0_6, %c0_7], %12 {strides = array<i32>} : memref<512x128xbf16, #tpu.memory_space<vmem>>, vector<512x128xbf16>,
    return
  }
  func.func @transform_0(%arg0: i32, %arg1: i32, %arg2: i32) -> (i32, i32) {
    %c0_i32 = arith.constant 0 : i32
    return %arg0, %arg2 : i32, i32
  }
  func.func @transform_1(%arg0: i32, %arg1: i32, %arg2: i32) -> (i32, i32) {
    %c0_i32 = arith.constant 0 : i32
    return %arg2, %arg1 : i32, i32
  }
  func.func @transform_2(%arg0: i32, %arg1: i32, %arg2: i32) -> (i32, i32) {
    %c0_i32 = arith.constant 0 : i32
    %c0_i32_0 = arith.constant 0 : i32
    return %c0_i32, %arg1 : i32, i32
  }
  func.func @transform_3(%arg0: i32, %arg1: i32, %arg2: i32) -> (i32, i32) {
    %c0_i32 = arith.constant 0 : i32
    return %arg0, %arg1 : i32, i32
  }
}

</mosaic_0001>

<llo_original>
// kernel: tpu_custom_call.1
$region0: #{tpu_custom_call.1}
  #allocation0 [shape = 'u32[]', space=smem, size = 0x4, offset = 0x4, fixed_abs, tag = 'smem constant byte address 0x4 - core index']
  #allocation1 [shape = 'u32[144,128]{1,0:T(1,128)}', space=vmem, size = 0x12000, scoped, tag = 'internal scratch']
  %s0 = inlined_call_operand.hbm [shape: bf16[2048,256], index: 0, kind: input, shape index: {}]
  %s1 = inlined_call_operand.hbm [shape: bf16[256,128], index: 1, kind: input, shape index: {}]
  %s2 = inlined_call_operand.vmem [shape: f32[2,128], index: 2, kind: input, shape index: {}]
  %s3 = inlined_call_operand.hbm [shape: bf16[2048,128], index: 3, kind: output, shape index: {}]
  %s4 = sld [smem:[#allocation0]]
  $region53: #{tpu_custom_call.1} parent=0
    _
  %s6 = ssub.s32 1, %s4
  %s7 = scalar_select 0, %s6, %s4
  $region1: #{tpu_custom_call.1} parent=0
    #allocation2 [shape = 'u8[524288]{0}', space=vmem, size = 0x80000, scoped, tag = 'input window, operand 0']
    #allocation3 [shape = 's32[2]{0}', space=sflag, size = 0x8, scoped, tag = 'scoped memory for tpu_custom_call.1']
    #allocation4 [shape = 's32[2]{0}', space=sflag, size = 0x8, scoped, tag = 'scoped memory for tpu_custom_call.1']
    #allocation5 [shape = 'u8[65536]{0}', space=vmem, size = 0x10000, scoped, tag = 'input window, operand 1, single buffered']
    #allocation6 [shape = 's32[1]{0}', space=sflag, size = 0x4, scoped, tag = 'scoped memory for tpu_custom_call.1']
    #allocation7 [shape = 'u8[262144]{0}', space=vmem, size = 0x40000, scoped, tag = 'output window, operand 0']
    %8 = vsyncpa [#allocation3], 0
    %s9 = scalar_lea.sflag [#allocation3], 1
    %10 = vsyncpa %s9, 0
    %11 = vsyncpa [#allocation6], 0
    %12 = vsyncpa [#allocation4], 0
    %s13 = scalar_lea.sflag [#allocation4], 1
    %14 = vsyncpa %s13, 0
    loop: start=0, step=1, limit=6
    $region2: #{tpu_custom_call.1} parent=1 // loop_pre_header
      _
    $region3: #{tpu_custom_call.1} parent=1 // loop_header
      %s16 = sphi 0, %s20
      %p17 = scmp.ge.s32.totalorder %s16, 6
      %s23 = sphi 0, %s42
      %s24 = sphi 0, %s38
      %s25 = sphi 0, %s34
      %s26 = sphi 0, %s23
      %s27 = sphi 0, %s24
      %s28 = sphi 0, %s25
      %s29 = sphi 0, %s26
      %s30 = sphi 0, %s27
      %s31 = sphi 0, %s28
      %s47 = sphi 0, %s49
      %s50 = sphi 0, %s47
      %s51 = sphi 0, %s50
      %s67 = sphi 0, %s51
      %s75 = sphi 0, %s77
      %s78 = sphi 0, %s75
      %s79 = sphi 0, %s78
      %s95 = sphi 0, %s79
      %s101 = sphi 0, %s103
      %s104 = sphi 0, %s101
      %s105 = sphi 0, %s104
      %s121 = sphi 0, %s105
      %s129 = sphi 0, %s131
      %s132 = sphi 0, %s129
      %s133 = sphi 0, %s132
      %s149 = sphi 0, %s133
    $region4: #{tpu_custom_call.1} parent=1 // loop_header_branch
      %19 = sbr.rel (%p17) target = $region8
    $region5: #{tpu_custom_call.1} parent=1 // loop_body
      %s21 = ssub.s32 %s16, 1
      %s22 = ssub.s32 %s16, 2
      %s32 = sadd.s32 1, %s25
      %p33 = scmp.ge.s32.totalorder %s32, 1
      %s34 = scalar_select %p33, 0, %s32
      %s35 = sadd.s32 1, %s24
      %s36 = scalar_select %p33, %s35, %s24
      %p37 = scmp.ge.s32.totalorder %s36, 1
      %s38 = scalar_select %p37, 0, %s36
      %s39 = sadd.s32 1, %s23
      %s40 = scalar_select %p37, %s39, %s23
      %p41 = scmp.ge.s32.totalorder %s40, 4
      %s42 = scalar_select %p41, 0, %s40
      %s43 = ssub.s32 %s23, %s42
      %s44 = ssub.s32 %s25, %s34
      %s45 = sor.u32 %s43, %s44
      %p46 = scmp.eq.s32.totalorder %s45, 0
      %s48 = sadd.s32 %s47, 1
      %s49 = scalar_select %p46, %s47, %s48
      %p52 = pneg %p46
      %p53 = scmp.eq.s32.totalorder %s16, 3
      %p54 = por %p52, %p53
      %p55 = scmp.ne.s32.totalorder %s47, %s50
      %p56 = scmp.eq.s32.totalorder %s16, 0
      %p57 = por %p55, %p56
      %p58 = scmp.ne.s32.totalorder %s47, %s50
      %p59 = scmp.eq.s32.totalorder %s21, 3
      %p60 = por %p58, %p59
      %p61 = scmp.ne.s32.totalorder %s50, %s51
      %p62 = scmp.eq.s32.totalorder %s21, 0
      %p63 = por %p61, %p62
      %p64 = scmp.ne.s32.totalorder %s50, %s51
      %p65 = scmp.eq.s32.totalorder %s22, 3
      %p66 = por %p64, %p65
      %p68 = scmp.ne.s32.totalorder %s51, %s67
      %p69 = scmp.eq.s32.totalorder %s22, 0
      %p70 = por %p68, %p69
      %s71 = ssub.s32 %s25, %s34
      %s72 = ssub.s32 %s24, %s38
      %s73 = sor.u32 %s71, %s72
      %p74 = scmp.eq.s32.totalorder %s73, 0
      %s76 = sadd.s32 %s75, 1
      %s77 = scalar_select %p74, %s75, %s76
      %p80 = pneg %p74
      %p81 = scmp.eq.s32.totalorder %s16, 3
      %p82 = por %p80, %p81
      %p83 = scmp.ne.s32.totalorder %s75, %s78
      %p84 = scmp.eq.s32.totalorder %s16, 0
      %p85 = por %p83, %p84
      %p86 = scmp.ne.s32.totalorder %s75, %s78
      %p87 = scmp.eq.s32.totalorder %s21, 3
      %p88 = por %p86, %p87
      %p89 = scmp.ne.s32.totalorder %s78, %s79
      %p90 = scmp.eq.s32.totalorder %s21, 0
      %p91 = por %p89, %p90
      %p92 = scmp.ne.s32.totalorder %s78, %s79
      %p93 = scmp.eq.s32.totalorder %s22, 3
      %p94 = por %p92, %p93
      %p96 = scmp.ne.s32.totalorder %s79, %s95
      %p97 = scmp.eq.s32.totalorder %s22, 0
      %p98 = por %p96, %p97
      %s99 = ssub.s32 %s24, %s38
      %p100 = scmp.eq.s32.totalorder %s99, 0
      %s102 = sadd.s32 %s101, 1
      %s103 = scalar_select %p100, %s101, %s102
      %p106 = pneg %p100
      %p107 = scmp.eq.s32.totalorder %s16, 3
      %p108 = por %p106, %p107
      %p109 = scmp.ne.s32.totalorder %s101, %s104
      %p110 = scmp.eq.s32.totalorder %s16, 0
      %p111 = por %p109, %p110
      %p112 = scmp.ne.s32.totalorder %s101, %s104
      %p113 = scmp.eq.s32.totalorder %s21, 3
      %p114 = por %p112, %p113
      %p115 = scmp.ne.s32.totalorder %s104, %s105
      %p116 = scmp.eq.s32.totalorder %s21, 0
      %p117 = por %p115, %p116
      %p118 = scmp.ne.s32.totalorder %s104, %s105
      %p119 = scmp.eq.s32.totalorder %s22, 3
      %p120 = por %p118, %p119
      %p122 = scmp.ne.s32.totalorder %s105, %s121
      %p123 = scmp.eq.s32.totalorder %s22, 0
      %p124 = por %p122, %p123
      %s125 = ssub.s32 %s23, %s42
      %s126 = ssub.s32 %s24, %s38
      %s127 = sor.u32 %s125, %s126
      %p128 = scmp.eq.s32.totalorder %s127, 0
      %s130 = sadd.s32 %s129, 1
      %s131 = scalar_select %p128, %s129, %s130
      %p134 = pneg %p128
      %p135 = scmp.eq.s32.totalorder %s16, 3
      %p136 = por %p134, %p135
      %p137 = scmp.ne.s32.totalorder %s129, %s132
      %p138 = scmp.eq.s32.totalorder %s16, 0
      %p139 = por %p137, %p138
      %p140 = scmp.ne.s32.totalorder %s129, %s132
      %p141 = scmp.eq.s32.totalorder %s21, 3
      %p142 = por %p140, %p141
      %p143 = scmp.ne.s32.totalorder %s132, %s133
      %p144 = scmp.eq.s32.totalorder %s21, 0
      %p145 = por %p143, %p144
      %p146 = scmp.ne.s32.totalorder %s132, %s133
      %p147 = scmp.eq.s32.totalorder %s22, 3
      %p148 = por %p146, %p147
      %p150 = scmp.ne.s32.totalorder %s133, %s149
      %p151 = scmp.eq.s32.totalorder %s22, 0
      %p152 = por %p150, %p151
      %p153 = scmp.le.s32.totalorder 1, %s16
      %p154 = scmp.lt.s32.totalorder %s16, 5
      %p155 = pnand %p153, %p154
      %p156 = pneg %p155
      // Predicated region
      $region9: #{tpu_custom_call.1} parent=5 // pred_check
        _
      $region10: #{tpu_custom_call.1} parent=5 // pred_check_branch
        %158 = sbr.rel (%p155) target = $region12
      $region11: #{tpu_custom_call.1} parent=5 // pred_region
        %s159 = ssub.s32 %s16, 1
        // Predicated region
        $region13: #{tpu_custom_call.1} parent=11 // pred_check
          %p160 = pneg %p91
        $region14: #{tpu_custom_call.1} parent=11 // pred_check_branch
          %162 = sbr.rel (%p160) target = $region16
        $region15: #{tpu_custom_call.1} parent=11 // pred_region
          %s163 = smul.u32 32, %s28
          %s165 = ssub.s32 2048, 2048
          %166 = vsyncadd [#allocation6], %s165
          %s167 = sadd.s32 %s27, %s163
          %s168 = smul.addr %s167, 64
          %s169 = scalar_lea.hbm %s1, %s168
          %s170 = sshll.u32 [#allocation5], 4
          %s171 = int_to_ptr.vmem [resolvable:$true] %s170
          %176 = dma.hbm_to_vmem [thread:$0]  %s169, 2048, %s171, [#allocation6], 64, 64, 4
        $region16: #{tpu_custom_call.1} parent=11 // pred_fallthru
          _
        // Predicated region
        $region17: #{tpu_custom_call.1} parent=11 // pred_check
          %p177 = pneg %p117
        $region18: #{tpu_custom_call.1} parent=11 // pred_check_branch
          %179 = sbr.rel (%p177) target = $region20
        $region19: #{tpu_custom_call.1} parent=11 // pred_region
          %p180 = scmp.lt.s32.totalorder %s27, 0
          %s181 = scalar_select %p180, %s27, 0
          %s182 = smul.addr %s181, 2
          %s183 = scalar_lea.vmem %s2, %s182
        $region20: #{tpu_custom_call.1} parent=11 // pred_fallthru
          _
      $region12: #{tpu_custom_call.1} parent=5 // pred_fallthru
        _
      %p184 = scmp.lt.s32.totalorder %s16, 4
      // Predicated region
      $region21: #{tpu_custom_call.1} parent=5 // pred_check
        %p185 = pneg %p184
      $region22: #{tpu_custom_call.1} parent=5 // pred_check_branch
        %187 = sbr.rel (%p185) target = $region24
      $region23: #{tpu_custom_call.1} parent=5 // pred_region
        // Predicated region
        $region25: #{tpu_custom_call.1} parent=23 // pred_check
          %p188 = pneg %p57
        $region26: #{tpu_custom_call.1} parent=23 // pred_check_branch
          %190 = sbr.rel (%p188) target = $region28
        $region27: #{tpu_custom_call.1} parent=23 // pred_region
          %s191 = sand.u32 %s47, 1
          %s192 = scalar_lea.sflag [#allocation3], %s191
          %s193 = sand.u32 %s47, 1
          %s194 = smul.addr %s193, 512
          %s195 = scalar_lea.vmem [#allocation2], %s194
          %s196 = smul.u32 64, %s23
          %s197 = smul.u32 2, %s25
          %s199 = ssub.s32 8192, 8192
          %200 = vsyncadd %s192, %s199
          %s201 = smul.addr %s196, 2
          %s202 = sadd.s32 %s197, %s201
          %s203 = smul.addr %s202, 64
          %s204 = scalar_lea.hbm %s0, %s203
          %s205 = sshll.u32 %s195, 4
          %s206 = int_to_ptr.vmem [resolvable:$true] %s205
          %211 = dma.hbm_to_vmem [thread:$0]  %s204, 8192, %s206, %s192, 128, 128, 8
        $region28: #{tpu_custom_call.1} parent=23 // pred_fallthru
          _
      $region24: #{tpu_custom_call.1} parent=5 // pred_fallthru
        _
      %p212 = scmp.le.s32.totalorder 1, %s16
      %p213 = scmp.lt.s32.totalorder %s16, 5
      %p214 = pnand %p212, %p213
      %p215 = pneg %p214
      // Predicated region
      $region29: #{tpu_custom_call.1} parent=5 // pred_check
        _
      $region30: #{tpu_custom_call.1} parent=5 // pred_check_branch
        %217 = sbr.rel (%p214) target = $region32
      $region31: #{tpu_custom_call.1} parent=5 // pred_region
        %s218 = ssub.s32 %s16, 1
        %s219 = sand.u32 %s50, 1
        %s220 = scalar_lea.sflag [#allocation3], %s219
        %s221 = sand.u32 %s50, 1
        %s222 = smul.addr %s221, 512
        %s223 = scalar_lea.vmem [#allocation2], %s222
        // Predicated region
        $region33: #{tpu_custom_call.1} parent=31 // pred_check
          %p224 = pneg %p63
        $region34: #{tpu_custom_call.1} parent=31 // pred_check_branch
          %226 = sbr.rel (%p224) target = $region36
        $region35: #{tpu_custom_call.1} parent=31 // pred_region
          %227 = dma.done %s220, 8192
        $region36: #{tpu_custom_call.1} parent=31 // pred_fallthru
          _
        // Predicated region
        $region37: #{tpu_custom_call.1} parent=31 // pred_check
          %p228 = pneg %p91
        $region38: #{tpu_custom_call.1} parent=31 // pred_check_branch
          %230 = sbr.rel (%p228) target = $region40
        $region39: #{tpu_custom_call.1} parent=31 // pred_region
          %231 = dma.done [#allocation6], 2048
        $region40: #{tpu_custom_call.1} parent=31 // pred_fallthru
          _
        %s232 = sand.u32 %s50, 1
        %s233 = scalar_lea.sflag [#allocation3], %s232
        %s234 = sand.u32 %s50, 1
        %s235 = smul.addr %s234, 512
        %s236 = scalar_lea.vmem [#allocation2], %s235
        %p237 = pneg %p63
        %p238 = pneg %p60
        %p239 = pneg %p91
        %p240 = pneg %p88
        %p241 = scmp.lt.s32.totalorder %s27, 0
        %s242 = scalar_select %p241, %s27, 0
        %s243 = smul.addr %s242, 2
        %s244 = scalar_lea.vmem %s2, %s243
        %p245 = pneg %p117
        %p246 = pneg %p114
        %p247 = pneg %p145
        %p248 = pneg %p142
        %s249 = sand.u32 %s132, 1
        %s250 = scalar_lea.sflag [#allocation4], %s249
        %s251 = sand.u32 %s132, 1
        %s252 = smul.addr %s251, 256
        %s253 = scalar_lea.vmem [#allocation7], %s252
        %s254 = smul.u32 64, %s26
        %s255 = smul.u32 2, %s28
        %s256 = smul.u32 32, %s28
        %p257 = scmp.lt.s32.totalorder %s27, 0
        %s258 = scalar_select %p257, %s27, 0
        %s259 = smul.addr %s258, 2
        %s260 = scalar_lea.vmem %s2, %s259
        %s261 = smul.u32 64, %s26
        %v263 = vld [vmem:[%s223] sm:$0xff]
        %v264 = vld [vmem:[%s223 + $0x8] sm:$0xff]
        %v265 = vld [vmem:[%s223 + $0x10] sm:$0xff]
        %v266 = vld [vmem:[%s223 + $0x18] sm:$0xff]
        %v267 = vld [vmem:[%s223 + $0x20] sm:$0xff]
        %v268 = vld [vmem:[%s223 + $0x28] sm:$0xff]
        %v269 = vld [vmem:[%s223 + $0x30] sm:$0xff]
        %v270 = vld [vmem:[%s223 + $0x38] sm:$0xff]
        %v271 = vld [vmem:[%s223 + $0x40] sm:$0xff]
        %v272 = vld [vmem:[%s223 + $0x48] sm:$0xff]
        %v273 = vld [vmem:[%s223 + $0x50] sm:$0xff]
        %v274 = vld [vmem:[%s223 + $0x58] sm:$0xff]
        %v275 = vld [vmem:[%s223 + $0x60] sm:$0xff]
        %v276 = vld [vmem:[%s223 + $0x68] sm:$0xff]
        %v277 = vld [vmem:[%s223 + $0x70] sm:$0xff]
        %v278 = vld [vmem:[%s223 + $0x78] sm:$0xff]
        %v279 = vld [vmem:[%s223 + $0x80] sm:$0xff]
        %v280 = vld [vmem:[%s223 + $0x88] sm:$0xff]
        %v281 = vld [vmem:[%s223 + $0x90] sm:$0xff]
        %v282 = vld [vmem:[%s223 + $0x98] sm:$0xff]
        %v283 = vld [vmem:[%s223 + $0xa0] sm:$0xff]
        %v284 = vld [vmem:[%s223 + $0xa8] sm:$0xff]
        %v285 = vld [vmem:[%s223 + $0xb0] sm:$0xff]
        %v286 = vld [vmem:[%s223 + $0xb8] sm:$0xff]
        %v287 = vld [vmem:[%s223 + $0xc0] sm:$0xff]
        %v288 = vld [vmem:[%s223 + $0xc8] sm:$0xff]
        %v289 = vld [vmem:[%s223 + $0xd0] sm:$0xff]
        %v290 = vld [vmem:[%s223 + $0xd8] sm:$0xff]
        %v291 = vld [vmem:[%s223 + $0xe0] sm:$0xff]
        %v292 = vld [vmem:[%s223 + $0xe8] sm:$0xff]
        %v293 = vld [vmem:[%s223 + $0xf0] sm:$0xff]
        %v294 = vld [vmem:[%s223 + $0xf8] sm:$0xff]
        %v295 = vld [vmem:[%s223 + $0x100] sm:$0xff]
        %v296 = vld [vmem:[%s223 + $0x108] sm:$0xff]
        %v297 = vld [vmem:[%s223 + $0x110] sm:$0xff]
        %v298 = vld [vmem:[%s223 + $0x118] sm:$0xff]
        %v299 = vld [vmem:[%s223 + $0x120] sm:$0xff]
        %v300 = vld [vmem:[%s223 + $0x128] sm:$0xff]
        %v301 = vld [vmem:[%s223 + $0x130] sm:$0xff]
        %v302 = vld [vmem:[%s223 + $0x138] sm:$0xff]
        %v303 = vld [vmem:[%s223 + $0x140] sm:$0xff]
        %v304 = vld [vmem:[%s223 + $0x148] sm:$0xff]
        %v305 = vld [vmem:[%s223 + $0x150] sm:$0xff]
        %v306 = vld [vmem:[%s223 + $0x158] sm:$0xff]
        %v307 = vld [vmem:[%s223 + $0x160] sm:$0xff]
        %v308 = vld [vmem:[%s223 + $0x168] sm:$0xff]
        %v309 = vld [vmem:[%s223 + $0x170] sm:$0xff]
        %v310 = vld [vmem:[%s223 + $0x178] sm:$0xff]
        %v311 = vld [vmem:[%s223 + $0x180] sm:$0xff]
        %v312 = vld [vmem:[%s223 + $0x188] sm:$0xff]
        %v313 = vld [vmem:[%s223 + $0x190] sm:$0xff]
        %v314 = vld [vmem:[%s223 + $0x198] sm:$0xff]
        %v315 = vld [vmem:[%s223 + $0x1a0] sm:$0xff]
        %v316 = vld [vmem:[%s223 + $0x1a8] sm:$0xff]
        %v317 = vld [vmem:[%s223 + $0x1b0] sm:$0xff]
        %v318 = vld [vmem:[%s223 + $0x1b8] sm:$0xff]
        %v319 = vld [vmem:[%s223 + $0x1c0] sm:$0xff]
        %v320 = vld [vmem:[%s223 + $0x1c8] sm:$0xff]
        %v321 = vld [vmem:[%s223 + $0x1d0] sm:$0xff]
        %v322 = vld [vmem:[%s223 + $0x1d8] sm:$0xff]
        %v323 = vld [vmem:[%s223 + $0x1e0] sm:$0xff]
        %v324 = vld [vmem:[%s223 + $0x1e8] sm:$0xff]
        %v325 = vld [vmem:[%s223 + $0x1f0] sm:$0xff]
        %v326 = vld [vmem:[%s223 + $0x1f8] sm:$0xff]
        %v327 = vld [vmem:[#allocation5] sm:$0xf]
        %v328 = vld [vmem:[#allocation5 + $0x4] sm:$0xf]
        %v329 = vld [vmem:[#allocation5 + $0x8] sm:$0xf]
        %v330 = vld [vmem:[#allocation5 + $0xc] sm:$0xf]
        %v331 = vld [vmem:[#allocation5 + $0x10] sm:$0xf]
        %v332 = vld [vmem:[#allocation5 + $0x14] sm:$0xf]
        %v333 = vld [vmem:[#allocation5 + $0x18] sm:$0xf]
        %v334 = vld [vmem:[#allocation5 + $0x1c] sm:$0xf]
        %v335 = vld [vmem:[#allocation5 + $0x20] sm:$0xf]
        %v336 = vld [vmem:[#allocation5 + $0x24] sm:$0xf]
        %v337 = vld [vmem:[#allocation5 + $0x28] sm:$0xf]
        %v338 = vld [vmem:[#allocation5 + $0x2c] sm:$0xf]
        %v339 = vld [vmem:[#allocation5 + $0x30] sm:$0xf]
        %v340 = vld [vmem:[#allocation5 + $0x34] sm:$0xf]
        %v341 = vld [vmem:[#allocation5 + $0x38] sm:$0xf]
        %v342 = vld [vmem:[#allocation5 + $0x3c] sm:$0xf]
        %v343 = vld [vmem:[#allocation5 + $0x40] sm:$0xf]
        %v344 = vld [vmem:[#allocation5 + $0x44] sm:$0xf]
        %v345 = vld [vmem:[#allocation5 + $0x48] sm:$0xf]
        %v346 = vld [vmem:[#allocation5 + $0x4c] sm:$0xf]
        %v347 = vld [vmem:[#allocation5 + $0x50] sm:$0xf]
        %v348 = vld [vmem:[#allocation5 + $0x54] sm:$0xf]
        %v349 = vld [vmem:[#allocation5 + $0x58] sm:$0xf]
        %v350 = vld [vmem:[#allocation5 + $0x5c] sm:$0xf]
        %v351 = vld [vmem:[#allocation5 + $0x60] sm:$0xf]
        %v352 = vld [vmem:[#allocation5 + $0x64] sm:$0xf]
        %v353 = vld [vmem:[#allocation5 + $0x68] sm:$0xf]
        %v354 = vld [vmem:[#allocation5 + $0x6c] sm:$0xf]
        %v355 = vld [vmem:[#allocation5 + $0x70] sm:$0xf]
        %v356 = vld [vmem:[#allocation5 + $0x74] sm:$0xf]
        %v357 = vld [vmem:[#allocation5 + $0x78] sm:$0xf]
        %v358 = vld [vmem:[#allocation5 + $0x7c] sm:$0xf]
        %v423 = vunpack.c.l.b16 %v263
        %v424 = vunpack.c.h.b16 %v263
        %v425 = vunpack.c.l.b16 %v264
        %v426 = vunpack.c.h.b16 %v264
        %v427 = vunpack.c.l.b16 %v265
        %v428 = vunpack.c.h.b16 %v265
        %v429 = vunpack.c.l.b16 %v266
        %v430 = vunpack.c.h.b16 %v266
        %v431 = vunpack.c.l.b16 %v267
        %v432 = vunpack.c.h.b16 %v267
        %v433 = vunpack.c.l.b16 %v268
        %v434 = vunpack.c.h.b16 %v268
        %v435 = vunpack.c.l.b16 %v269
        %v436 = vunpack.c.h.b16 %v269
        %v437 = vunpack.c.l.b16 %v270
        %v438 = vunpack.c.h.b16 %v270
        %v439 = vunpack.c.l.b16 %v271
        %v440 = vunpack.c.h.b16 %v271
        %v441 = vunpack.c.l.b16 %v272
        %v442 = vunpack.c.h.b16 %v272
        %v443 = vunpack.c.l.b16 %v273
        %v444 = vunpack.c.h.b16 %v273
        %v445 = vunpack.c.l.b16 %v274
        %v446 = vunpack.c.h.b16 %v274
        %v447 = vunpack.c.l.b16 %v275
        %v448 = vunpack.c.h.b16 %v275
        %v449 = vunpack.c.l.b16 %v276
        %v450 = vunpack.c.h.b16 %v276
        %v451 = vunpack.c.l.b16 %v277
        %v452 = vunpack.c.h.b16 %v277
        %v453 = vunpack.c.l.b16 %v278
        %v454 = vunpack.c.h.b16 %v278
        %v455 = vunpack.c.l.b16 %v279
        %v456 = vunpack.c.h.b16 %v279
        %v457 = vunpack.c.l.b16 %v280
        %v458 = vunpack.c.h.b16 %v280
        %v459 = vunpack.c.l.b16 %v281
        %v460 = vunpack.c.h.b16 %v281
        %v461 = vunpack.c.l.b16 %v282
        %v462 = vunpack.c.h.b16 %v282
        %v463 = vunpack.c.l.b16 %v283
        %v464 = vunpack.c.h.b16 %v283
        %v465 = vunpack.c.l.b16 %v284
        %v466 = vunpack.c.h.b16 %v284
        %v467 = vunpack.c.l.b16 %v285
        %v468 = vunpack.c.h.b16 %v285
        %v469 = vunpack.c.l.b16 %v286
        %v470 = vunpack.c.h.b16 %v286
        %v471 = vunpack.c.l.b16 %v287
        %v472 = vunpack.c.h.b16 %v287
        %v473 = vunpack.c.l.b16 %v288
        %v474 = vunpack.c.h.b16 %v288
        %v475 = vunpack.c.l.b16 %v289
        %v476 = vunpack.c.h.b16 %v289
        %v477 = vunpack.c.l.b16 %v290
        %v478 = vunpack.c.h.b16 %v290
        %v479 = vunpack.c.l.b16 %v291
        %v480 = vunpack.c.h.b16 %v291
        %v481 = vunpack.c.l.b16 %v292
        %v482 = vunpack.c.h.b16 %v292
        %v483 = vunpack.c.l.b16 %v293
        %v484 = vunpack.c.h.b16 %v293
        %v485 = vunpack.c.l.b16 %v294
        %v486 = vunpack.c.h.b16 %v294
        %v487 = vunpack.c.l.b16 %v295
        %v488 = vunpack.c.h.b16 %v295
        %v489 = vunpack.c.l.b16 %v296
        %v490 = vunpack.c.h.b16 %v296
        %v491 = vunpack.c.l.b16 %v297
        %v492 = vunpack.c.h.b16 %v297
        %v493 = vunpack.c.l.b16 %v298
        %v494 = vunpack.c.h.b16 %v298
        %v495 = vunpack.c.l.b16 %v299
        %v496 = vunpack.c.h.b16 %v299
        %v497 = vunpack.c.l.b16 %v300
        %v498 = vunpack.c.h.b16 %v300
        %v499 = vunpack.c.l.b16 %v301
        %v500 = vunpack.c.h.b16 %v301
        %v501 = vunpack.c.l.b16 %v302
        %v502 = vunpack.c.h.b16 %v302
        %v503 = vunpack.c.l.b16 %v303
        %v504 = vunpack.c.h.b16 %v303
        %v505 = vunpack.c.l.b16 %v304
        %v506 = vunpack.c.h.b16 %v304
        %v507 = vunpack.c.l.b16 %v305
        %v508 = vunpack.c.h.b16 %v305
        %v509 = vunpack.c.l.b16 %v306
        %v510 = vunpack.c.h.b16 %v306
        %v511 = vunpack.c.l.b16 %v307
        %v512 = vunpack.c.h.b16 %v307
        %v513 = vunpack.c.l.b16 %v308
        %v514 = vunpack.c.h.b16 %v308
        %v515 = vunpack.c.l.b16 %v309
        %v516 = vunpack.c.h.b16 %v309
        %v517 = vunpack.c.l.b16 %v310
        %v518 = vunpack.c.h.b16 %v310
        %v519 = vunpack.c.l.b16 %v311
        %v520 = vunpack.c.h.b16 %v311
        %v521 = vunpack.c.l.b16 %v312
        %v522 = vunpack.c.h.b16 %v312
        %v523 = vunpack.c.l.b16 %v313
        %v524 = vunpack.c.h.b16 %v313
        %v525 = vunpack.c.l.b16 %v314
        %v526 = vunpack.c.h.b16 %v314
        %v527 = vunpack.c.l.b16 %v315
        %v528 = vunpack.c.h.b16 %v315
        %v529 = vunpack.c.l.b16 %v316
        %v530 = vunpack.c.h.b16 %v316
        %v531 = vunpack.c.l.b16 %v317
        %v532 = vunpack.c.h.b16 %v317
        %v533 = vunpack.c.l.b16 %v318
        %v534 = vunpack.c.h.b16 %v318
        %v535 = vunpack.c.l.b16 %v319
        %v536 = vunpack.c.h.b16 %v319
        %v537 = vunpack.c.l.b16 %v320
        %v538 = vunpack.c.h.b16 %v320
        %v539 = vunpack.c.l.b16 %v321
        %v540 = vunpack.c.h.b16 %v321
        %v541 = vunpack.c.l.b16 %v322
        %v542 = vunpack.c.h.b16 %v322
        %v543 = vunpack.c.l.b16 %v323
        %v544 = vunpack.c.h.b16 %v323
        %v545 = vunpack.c.l.b16 %v324
        %v546 = vunpack.c.h.b16 %v324
        %v547 = vunpack.c.l.b16 %v325
        %v548 = vunpack.c.h.b16 %v325
        %v549 = vunpack.c.l.b16 %v326
        %v550 = vunpack.c.h.b16 %v326
        %v551 = vpack.c.b16 %v425, %v423
        %v552 = vpack.c.b16 %v426, %v424
        %v553 = vpack.c.b16 %v429, %v427
        %v554 = vpack.c.b16 %v430, %v428
        %v555 = vpack.c.b16 %v433, %v431
        %v556 = vpack.c.b16 %v434, %v432
        %v557 = vpack.c.b16 %v437, %v435
        %v558 = vpack.c.b16 %v438, %v436
        %v559 = vpack.c.b16 %v441, %v439
        %v560 = vpack.c.b16 %v442, %v440
        %v561 = vpack.c.b16 %v445, %v443
        %v562 = vpack.c.b16 %v446, %v444
        %v563 = vpack.c.b16 %v449, %v447
        %v564 = vpack.c.b16 %v450, %v448
        %v565 = vpack.c.b16 %v453, %v451
        %v566 = vpack.c.b16 %v454, %v452
        %v567 = vpack.c.b16 %v457, %v455
        %v568 = vpack.c.b16 %v458, %v456
        %v569 = vpack.c.b16 %v461, %v459
        %v570 = vpack.c.b16 %v462, %v460
        %v571 = vpack.c.b16 %v465, %v463
        %v572 = vpack.c.b16 %v466, %v464
        %v573 = vpack.c.b16 %v469, %v467
        %v574 = vpack.c.b16 %v470, %v468
        %v575 = vpack.c.b16 %v473, %v471
        %v576 = vpack.c.b16 %v474, %v472
        %v577 = vpack.c.b16 %v477, %v475
        %v578 = vpack.c.b16 %v478, %v476
        %v579 = vpack.c.b16 %v481, %v479
        %v580 = vpack.c.b16 %v482, %v480
        %v581 = vpack.c.b16 %v485, %v483
        %v582 = vpack.c.b16 %v486, %v484
        %v583 = vpack.c.b16 %v489, %v487
        %v584 = vpack.c.b16 %v490, %v488
        %v585 = vpack.c.b16 %v493, %v491
        %v586 = vpack.c.b16 %v494, %v492
        %v587 = vpack.c.b16 %v497, %v495
        %v588 = vpack.c.b16 %v498, %v496
        %v589 = vpack.c.b16 %v501, %v499
        %v590 = vpack.c.b16 %v502, %v500
        %v591 = vpack.c.b16 %v505, %v503
        %v592 = vpack.c.b16 %v506, %v504
        %v593 = vpack.c.b16 %v509, %v507
        %v594 = vpack.c.b16 %v510, %v508
        %v595 = vpack.c.b16 %v513, %v511
        %v596 = vpack.c.b16 %v514, %v512
        %v597 = vpack.c.b16 %v517, %v515
        %v598 = vpack.c.b16 %v518, %v516
        %v599 = vpack.c.b16 %v521, %v519
        %v600 = vpack.c.b16 %v522, %v520
        %v601 = vpack.c.b16 %v525, %v523
        %v602 = vpack.c.b16 %v526, %v524
        %v603 = vpack.c.b16 %v529, %v527
        %v604 = vpack.c.b16 %v530, %v528
        %v605 = vpack.c.b16 %v533, %v531
        %v606 = vpack.c.b16 %v534, %v532
        %v607 = vpack.c.b16 %v537, %v535
        %v608 = vpack.c.b16 %v538, %v536
        %v609 = vpack.c.b16 %v541, %v539
        %v610 = vpack.c.b16 %v542, %v540
        %v611 = vpack.c.b16 %v545, %v543
        %v612 = vpack.c.b16 %v546, %v544
        %v613 = vpack.c.b16 %v549, %v547
        %v614 = vpack.c.b16 %v550, %v548
        %v711 = vunpack.c.l.b16 %v327
        %v712 = vunpack.c.l.b16 %v328
        %v713 = vunpack.c.l.b16 %v329
        %v714 = vunpack.c.l.b16 %v330
        %v715 = vunpack.c.l.b16 %v331
        %v716 = vunpack.c.l.b16 %v332
        %v717 = vunpack.c.l.b16 %v333
        %v718 = vunpack.c.l.b16 %v334
        %v719 = vunpack.c.l.b16 %v335
        %v720 = vunpack.c.l.b16 %v336
        %v721 = vunpack.c.l.b16 %v337
        %v722 = vunpack.c.l.b16 %v338
        %v723 = vunpack.c.l.b16 %v339
        %v724 = vunpack.c.l.b16 %v340
        %v725 = vunpack.c.l.b16 %v341
        %v726 = vunpack.c.l.b16 %v342
        %v727 = vunpack.c.l.b16 %v343
        %v728 = vunpack.c.l.b16 %v344
        %v729 = vunpack.c.l.b16 %v345
        %v730 = vunpack.c.l.b16 %v346
        %v731 = vunpack.c.l.b16 %v347
        %v732 = vunpack.c.l.b16 %v348
        %v733 = vunpack.c.l.b16 %v349
        %v734 = vunpack.c.l.b16 %v350
        %v735 = vunpack.c.l.b16 %v351
        %v736 = vunpack.c.l.b16 %v352
        %v737 = vunpack.c.l.b16 %v353
        %v738 = vunpack.c.l.b16 %v354
        %v739 = vunpack.c.l.b16 %v355
        %v740 = vunpack.c.l.b16 %v356
        %v741 = vunpack.c.l.b16 %v357
        %v742 = vunpack.c.l.b16 %v358
        %v743 = vpack.c.b16 %v712, %v711
        %v744 = vpack.c.b16 %v714, %v713
        %v745 = vpack.c.b16 %v716, %v715
        %v746 = vpack.c.b16 %v718, %v717
        %v747 = vpack.c.b16 %v720, %v719
        %v748 = vpack.c.b16 %v722, %v721
        %v749 = vpack.c.b16 %v724, %v723
        %v750 = vpack.c.b16 %v726, %v725
        %v751 = vpack.c.b16 %v728, %v727
        %v752 = vpack.c.b16 %v730, %v729
        %v753 = vpack.c.b16 %v732, %v731
        %v754 = vpack.c.b16 %v734, %v733
        %v755 = vpack.c.b16 %v736, %v735
        %v756 = vpack.c.b16 %v738, %v737
        %v757 = vpack.c.b16 %v740, %v739
        %v758 = vpack.c.b16 %v742, %v741
        %775 = vmatprep.subr.bf16.mxu0 0
        %776 = vmatpush1.bf16.msra.mxu0 %v750
        %777 = vmatprep.subr.bf16.mxu0 0
        %778 = vmatpush1.bf16.msra.mxu0 %v749
        %779 = vmatprep.subr.bf16.mxu0 0
        %780 = vmatpush1.bf16.msra.mxu0 %v748
        %781 = vmatprep.subr.bf16.mxu0 0
        %782 = vmatpush1.bf16.msra.mxu0 %v747
        %783 = vmatprep.subr.bf16.mxu0 0
        %784 = vmatpush1.bf16.msra.mxu0 %v746
        %785 = vmatprep.subr.bf16.mxu0 0
        %786 = vmatpush1.bf16.msra.mxu0 %v745
        %787 = vmatprep.subr.bf16.mxu0 0
        %788 = vmatpush1.bf16.msra.mxu0 %v744
        %789 = vmatprep.subr.bf16.mxu0 0
        %790 = vmatpush1.bf16.msra.mxu0 %v743
        %791 = vmatprep.subr.bf16.mxu0 0
        %792 = vmatpush2.bf16.msra.mxu0 %v758
        %793 = vmatprep.subr.bf16.mxu0 0
        %794 = vmatpush2.bf16.msra.mxu0 %v757
        %795 = vmatprep.subr.bf16.mxu0 0
        %796 = vmatpush2.bf16.msra.mxu0 %v756
        %797 = vmatprep.subr.bf16.mxu0 0
        %798 = vmatpush2.bf16.msra.mxu0 %v755
        %799 = vmatprep.subr.bf16.mxu0 0
        %800 = vmatpush2.bf16.msra.mxu0 %v754
        %801 = vmatprep.subr.bf16.mxu0 0
        %802 = vmatpush2.bf16.msra.mxu0 %v753
        %803 = vmatprep.subr.bf16.mxu0 0
        %804 = vmatpush2.bf16.msra.mxu0 %v752
        %805 = vmatprep.subr.bf16.mxu0 0
        %806 = vmatpush2.bf16.msra.mxu0 %v751
        %807 = vmatprep.mubr.bf16.mxu0 %v552
        %808 = vmatmul.mubr.bf16.gmra.mxu0 %v551
        %v809 = vpop.f32.mrf.mxu0
        %v810 = vadd.f32 0.0, %v809
        %v811 = vpop.f32.mrf.mxu0
        %v812 = vpop.f32.mrf.mxu0
        %v813 = vadd.f32 0.0, %v812
        %v814 = vpop.f32.mrf.mxu0
        %815 = vmatprep.mubr.bf16.mxu0 %v554
        %816 = vmatmul.mubr.bf16.gmra.mxu0 %v553
        %v817 = vpop.f32.mrf.mxu0
        %v818 = vadd.f32 0.0, %v817
        %v819 = vpop.f32.mrf.mxu0
        %v820 = vpop.f32.mrf.mxu0
        %v821 = vadd.f32 0.0, %v820
        %v822 = vpop.f32.mrf.mxu0
        %823 = vmatprep.mubr.bf16.mxu0 %v556
        %824 = vmatmul.mubr.bf16.gmra.mxu0 %v555
        %v825 = vpop.f32.mrf.mxu0
        %v826 = vadd.f32 0.0, %v825
        %v827 = vpop.f32.mrf.mxu0
        %v828 = vpop.f32.mrf.mxu0
        %v829 = vadd.f32 0.0, %v828
        %v830 = vpop.f32.mrf.mxu0
        %831 = vmatprep.mubr.bf16.mxu0 %v558
        %832 = vmatmul.mubr.bf16.gmra.mxu0 %v557
        %v833 = vpop.f32.mrf.mxu0
        %v834 = vadd.f32 0.0, %v833
        %v835 = vpop.f32.mrf.mxu0
        %v836 = vpop.f32.mrf.mxu0
        %v837 = vadd.f32 0.0, %v836
        %v838 = vpop.f32.mrf.mxu0
        %839 = vmatprep.mubr.bf16.mxu0 %v560
        %840 = vmatmul.mubr.bf16.gmra.mxu0 %v559
        %v841 = vpop.f32.mrf.mxu0
        %v842 = vadd.f32 0.0, %v841
        %v843 = vpop.f32.mrf.mxu0
        %v844 = vpop.f32.mrf.mxu0
        %v845 = vadd.f32 0.0, %v844
        %v846 = vpop.f32.mrf.mxu0
        %847 = vmatprep.mubr.bf16.mxu0 %v562
        %848 = vmatmul.mubr.bf16.gmra.mxu0 %v561
        %v849 = vpop.f32.mrf.mxu0
        %v850 = vadd.f32 0.0, %v849
        %v851 = vpop.f32.mrf.mxu0
        %v852 = vpop.f32.mrf.mxu0
        %v853 = vadd.f32 0.0, %v852
        %v854 = vpop.f32.mrf.mxu0
        %855 = vmatprep.mubr.bf16.mxu0 %v564
        %856 = vmatmul.mubr.bf16.gmra.mxu0 %v563
        %v857 = vpop.f32.mrf.mxu0
        %v858 = vadd.f32 0.0, %v857
        %v859 = vpop.f32.mrf.mxu0
        %v860 = vpop.f32.mrf.mxu0
        %v861 = vadd.f32 0.0, %v860
        %v862 = vpop.f32.mrf.mxu0
        %863 = vmatprep.mubr.bf16.mxu0 %v566
        %864 = vmatmul.mubr.bf16.gmra.mxu0 %v565
        %v865 = vpop.f32.mrf.mxu0
        %v866 = vadd.f32 0.0, %v865
        %v867 = vpop.f32.mrf.mxu0
        %v868 = vpop.f32.mrf.mxu0
        %v869 = vadd.f32 0.0, %v868
        %v870 = vpop.f32.mrf.mxu0
        %871 = vmatprep.mubr.bf16.mxu0 %v568
        %872 = vmatmul.mubr.bf16.gmra.mxu0 %v567
        %v873 = vpop.f32.mrf.mxu0
        %v874 = vadd.f32 0.0, %v873
        %v875 = vpop.f32.mrf.mxu0
        %v876 = vpop.f32.mrf.mxu0
        %v877 = vadd.f32 0.0, %v876
        %v878 = vpop.f32.mrf.mxu0
        %879 = vmatprep.mubr.bf16.mxu0 %v570
        %880 = vmatmul.mubr.bf16.gmra.mxu0 %v569
        %v881 = vpop.f32.mrf.mxu0
        %v882 = vadd.f32 0.0, %v881
        %v883 = vpop.f32.mrf.mxu0
        %v884 = vpop.f32.mrf.mxu0
        %v885 = vadd.f32 0.0, %v884
        %v886 = vpop.f32.mrf.mxu0
        %887 = vmatprep.mubr.bf16.mxu0 %v572
        %888 = vmatmul.mubr.bf16.gmra.mxu0 %v571
        %v889 = vpop.f32.mrf.mxu0
        %v890 = vadd.f32 0.0, %v889
        %v891 = vpop.f32.mrf.mxu0
        %v892 = vpop.f32.mrf.mxu0
        %v893 = vadd.f32 0.0, %v892
        %v894 = vpop.f32.mrf.mxu0
        %895 = vmatprep.mubr.bf16.mxu0 %v574
        %896 = vmatmul.mubr.bf16.gmra.mxu0 %v573
        %v897 = vpop.f32.mrf.mxu0
        %v898 = vadd.f32 0.0, %v897
        %v899 = vpop.f32.mrf.mxu0
        %v900 = vpop.f32.mrf.mxu0
        %v901 = vadd.f32 0.0, %v900
        %v902 = vpop.f32.mrf.mxu0
        %903 = vmatprep.mubr.bf16.mxu0 %v576
        %904 = vmatmul.mubr.bf16.gmra.mxu0 %v575
        %v905 = vpop.f32.mrf.mxu0
        %v906 = vadd.f32 0.0, %v905
        %v907 = vpop.f32.mrf.mxu0
        %v908 = vpop.f32.mrf.mxu0
        %v909 = vadd.f32 0.0, %v908
        %v910 = vpop.f32.mrf.mxu0
        %911 = vmatprep.mubr.bf16.mxu0 %v578
        %912 = vmatmul.mubr.bf16.gmra.mxu0 %v577
        %v913 = vpop.f32.mrf.mxu0
        %v914 = vadd.f32 0.0, %v913
        %v915 = vpop.f32.mrf.mxu0
        %v916 = vpop.f32.mrf.mxu0
        %v917 = vadd.f32 0.0, %v916
        %v918 = vpop.f32.mrf.mxu0
        %919 = vmatprep.mubr.bf16.mxu0 %v580
        %920 = vmatmul.mubr.bf16.gmra.mxu0 %v579
        %v921 = vpop.f32.mrf.mxu0
        %v922 = vadd.f32 0.0, %v921
        %v923 = vpop.f32.mrf.mxu0
        %v924 = vpop.f32.mrf.mxu0
        %v925 = vadd.f32 0.0, %v924
        %v926 = vpop.f32.mrf.mxu0
        %927 = vmatprep.mubr.bf16.mxu0 %v582
        %928 = vmatmul.mubr.bf16.gmra.mxu0 %v581
        %v929 = vpop.f32.mrf.mxu0
        %v930 = vadd.f32 0.0, %v929
        %v931 = vpop.f32.mrf.mxu0
        %v932 = vpop.f32.mrf.mxu0
        %v933 = vadd.f32 0.0, %v932
        %v934 = vpop.f32.mrf.mxu0
        %935 = vmatprep.mubr.bf16.mxu0 %v584
        %936 = vmatmul.mubr.bf16.gmra.mxu0 %v583
        %v937 = vpop.f32.mrf.mxu0
        %v938 = vadd.f32 0.0, %v937
        %v939 = vpop.f32.mrf.mxu0
        %v940 = vpop.f32.mrf.mxu0
        %v941 = vadd.f32 0.0, %v940
        %v942 = vpop.f32.mrf.mxu0
        %943 = vmatprep.mubr.bf16.mxu0 %v586
        %944 = vmatmul.mubr.bf16.gmra.mxu0 %v585
        %v945 = vpop.f32.mrf.mxu0
        %v946 = vadd.f32 0.0, %v945
        %v947 = vpop.f32.mrf.mxu0
        %v948 = vpop.f32.mrf.mxu0
        %v949 = vadd.f32 0.0, %v948
        %v950 = vpop.f32.mrf.mxu0
        %951 = vmatprep.mubr.bf16.mxu0 %v588
        %952 = vmatmul.mubr.bf16.gmra.mxu0 %v587
        %v953 = vpop.f32.mrf.mxu0
        %v954 = vadd.f32 0.0, %v953
        %v955 = vpop.f32.mrf.mxu0
        %v956 = vpop.f32.mrf.mxu0
        %v957 = vadd.f32 0.0, %v956
        %v958 = vpop.f32.mrf.mxu0
        %959 = vmatprep.mubr.bf16.mxu0 %v590
        %960 = vmatmul.mubr.bf16.gmra.mxu0 %v589
        %v961 = vpop.f32.mrf.mxu0
        %v962 = vadd.f32 0.0, %v961
        %v963 = vpop.f32.mrf.mxu0
        %v964 = vpop.f32.mrf.mxu0
        %v965 = vadd.f32 0.0, %v964
        %v966 = vpop.f32.mrf.mxu0
        %967 = vmatprep.mubr.bf16.mxu0 %v592
        %968 = vmatmul.mubr.bf16.gmra.mxu0 %v591
        %v969 = vpop.f32.mrf.mxu0
        %v970 = vadd.f32 0.0, %v969
        %v971 = vpop.f32.mrf.mxu0
        %v972 = vpop.f32.mrf.mxu0
        %v973 = vadd.f32 0.0, %v972
        %v974 = vpop.f32.mrf.mxu0
        %975 = vmatprep.mubr.bf16.mxu0 %v594
        %976 = vmatmul.mubr.bf16.gmra.mxu0 %v593
        %v977 = vpop.f32.mrf.mxu0
        %v978 = vadd.f32 0.0, %v977
        %v979 = vpop.f32.mrf.mxu0
        %v980 = vpop.f32.mrf.mxu0
        %v981 = vadd.f32 0.0, %v980
        %v982 = vpop.f32.mrf.mxu0
        %983 = vmatprep.mubr.bf16.mxu0 %v596
        %984 = vmatmul.mubr.bf16.gmra.mxu0 %v595
        %v985 = vpop.f32.mrf.mxu0
        %v986 = vadd.f32 0.0, %v985
        %v987 = vpop.f32.mrf.mxu0
        %v988 = vpop.f32.mrf.mxu0
        %v989 = vadd.f32 0.0, %v988
        %v990 = vpop.f32.mrf.mxu0
        %991 = vmatprep.mubr.bf16.mxu0 %v598
        %992 = vmatmul.mubr.bf16.gmra.mxu0 %v597
        %v993 = vpop.f32.mrf.mxu0
        %v994 = vadd.f32 0.0, %v993
        %v995 = vpop.f32.mrf.mxu0
        %v996 = vpop.f32.mrf.mxu0
        %v997 = vadd.f32 0.0, %v996
        %v998 = vpop.f32.mrf.mxu0
        %999 = vmatprep.mubr.bf16.mxu0 %v600
        %1000 = vmatmul.mubr.bf16.gmra.mxu0 %v599
        %v1001 = vpop.f32.mrf.mxu0
        %v1002 = vadd.f32 0.0, %v1001
        %v1003 = vpop.f32.mrf.mxu0
        %v1004 = vpop.f32.mrf.mxu0
        %v1005 = vadd.f32 0.0, %v1004
        %v1006 = vpop.f32.mrf.mxu0
        %1007 = vmatprep.mubr.bf16.mxu0 %v602
        %1008 = vmatmul.mubr.bf16.gmra.mxu0 %v601
        %v1009 = vpop.f32.mrf.mxu0
        %v1010 = vadd.f32 0.0, %v1009
        %v1011 = vpop.f32.mrf.mxu0
        %v1012 = vpop.f32.mrf.mxu0
        %v1013 = vadd.f32 0.0, %v1012
        %v1014 = vpop.f32.mrf.mxu0
        %1015 = vmatprep.mubr.bf16.mxu0 %v604
        %1016 = vmatmul.mubr.bf16.gmra.mxu0 %v603
        %v1017 = vpop.f32.mrf.mxu0
        %v1018 = vadd.f32 0.0, %v1017
        %v1019 = vpop.f32.mrf.mxu0
        %v1020 = vpop.f32.mrf.mxu0
        %v1021 = vadd.f32 0.0, %v1020
        %v1022 = vpop.f32.mrf.mxu0
        %1023 = vmatprep.mubr.bf16.mxu0 %v606
        %1024 = vmatmul.mubr.bf16.gmra.mxu0 %v605
        %v1025 = vpop.f32.mrf.mxu0
        %v1026 = vadd.f32 0.0, %v1025
        %v1027 = vpop.f32.mrf.mxu0
        %v1028 = vpop.f32.mrf.mxu0
        %v1029 = vadd.f32 0.0, %v1028
        %v1030 = vpop.f32.mrf.mxu0
        %1031 = vmatprep.mubr.bf16.mxu0 %v608
        %1032 = vmatmul.mubr.bf16.gmra.mxu0 %v607
        %v1033 = vpop.f32.mrf.mxu0
        %v1034 = vadd.f32 0.0, %v1033
        %v1035 = vpop.f32.mrf.mxu0
        %v1036 = vpop.f32.mrf.mxu0
        %v1037 = vadd.f32 0.0, %v1036
        %v1038 = vpop.f32.mrf.mxu0
        %1039 = vmatprep.mubr.bf16.mxu0 %v610
        %1040 = vmatmul.mubr.bf16.gmra.mxu0 %v609
        %v1041 = vpop.f32.mrf.mxu0
        %v1042 = vadd.f32 0.0, %v1041
        %v1043 = vpop.f32.mrf.mxu0
        %v1044 = vpop.f32.mrf.mxu0
        %v1045 = vadd.f32 0.0, %v1044
        %v1046 = vpop.f32.mrf.mxu0
        %1047 = vmatprep.mubr.bf16.mxu0 %v612
        %1048 = vmatmul.mubr.bf16.gmra.mxu0 %v611
        %v1049 = vpop.f32.mrf.mxu0
        %v1050 = vadd.f32 0.0, %v1049
        %v1051 = vpop.f32.mrf.mxu0
        %v1052 = vpop.f32.mrf.mxu0
        %v1053 = vadd.f32 0.0, %v1052
        %v1054 = vpop.f32.mrf.mxu0
        %1055 = vmatprep.mubr.bf16.mxu0 %v614
        %1056 = vmatmul.mubr.bf16.gmra.mxu0 %v613
        %v1057 = vpop.f32.mrf.mxu0
        %v1058 = vadd.f32 0.0, %v1057
        %v1059 = vpop.f32.mrf.mxu0
        %v1060 = vpop.f32.mrf.mxu0
        %v1061 = vadd.f32 0.0, %v1060
        %v1062 = vpop.f32.mrf.mxu0
        %1063 = vdwg.mxu0
        %v1064 = vld [vmem:[%s260] sm:$0x3]
        %v1065 = vlaneseq
        %v1066 = vshrl.u32 %v1065, 7
        %v1067 = vsub.s32 0, %v1066
        %v1068 = vrot.slane %v1064, %v1067
        %v1069 = vmul.f32 %v810, %v1068
        %v1070 = vmul.f32 %v813, %v1068
        %v1071 = vmul.f32 %v818, %v1068
        %v1072 = vmul.f32 %v821, %v1068
        %v1073 = vmul.f32 %v826, %v1068
        %v1074 = vmul.f32 %v829, %v1068
        %v1075 = vmul.f32 %v834, %v1068
        %v1076 = vmul.f32 %v837, %v1068
        %v1077 = vmul.f32 %v842, %v1068
        %v1078 = vmul.f32 %v845, %v1068
        %v1079 = vmul.f32 %v850, %v1068
        %v1080 = vmul.f32 %v853, %v1068
        %v1081 = vmul.f32 %v858, %v1068
        %v1082 = vmul.f32 %v861, %v1068
        %v1083 = vmul.f32 %v866, %v1068
        %v1084 = vmul.f32 %v869, %v1068
        %v1085 = vmul.f32 %v874, %v1068
        %v1086 = vmul.f32 %v877, %v1068
        %v1087 = vmul.f32 %v882, %v1068
        %v1088 = vmul.f32 %v885, %v1068
        %v1089 = vmul.f32 %v890, %v1068
        %v1090 = vmul.f32 %v893, %v1068
        %v1091 = vmul.f32 %v898, %v1068
        %v1092 = vmul.f32 %v901, %v1068
        %v1093 = vmul.f32 %v906, %v1068
        %v1094 = vmul.f32 %v909, %v1068
        %v1095 = vmul.f32 %v914, %v1068
        %v1096 = vmul.f32 %v917, %v1068
        %v1097 = vmul.f32 %v922, %v1068
        %v1098 = vmul.f32 %v925, %v1068
        %v1099 = vmul.f32 %v930, %v1068
        %v1100 = vmul.f32 %v933, %v1068
        %v1101 = vmul.f32 %v938, %v1068
        %v1102 = vmul.f32 %v941, %v1068
        %v1103 = vmul.f32 %v946, %v1068
        %v1104 = vmul.f32 %v949, %v1068
        %v1105 = vmul.f32 %v954, %v1068
        %v1106 = vmul.f32 %v957, %v1068
        %v1107 = vmul.f32 %v962, %v1068
        %v1108 = vmul.f32 %v965, %v1068
        %v1109 = vmul.f32 %v970, %v1068
        %v1110 = vmul.f32 %v973, %v1068
        %v1111 = vmul.f32 %v978, %v1068
        %v1112 = vmul.f32 %v981, %v1068
        %v1113 = vmul.f32 %v986, %v1068
        %v1114 = vmul.f32 %v989, %v1068
        %v1115 = vmul.f32 %v994, %v1068
        %v1116 = vmul.f32 %v997, %v1068
        %v1117 = vmul.f32 %v1002, %v1068
        %v1118 = vmul.f32 %v1005, %v1068
        %v1119 = vmul.f32 %v1010, %v1068
        %v1120 = vmul.f32 %v1013, %v1068
        %v1121 = vmul.f32 %v1018, %v1068
        %v1122 = vmul.f32 %v1021, %v1068
        %v1123 = vmul.f32 %v1026, %v1068
        %v1124 = vmul.f32 %v1029, %v1068
        %v1125 = vmul.f32 %v1034, %v1068
        %v1126 = vmul.f32 %v1037, %v1068
        %v1127 = vmul.f32 %v1042, %v1068
        %v1128 = vmul.f32 %v1045, %v1068
        %v1129 = vmul.f32 %v1050, %v1068
        %v1130 = vmul.f32 %v1053, %v1068
        %v1131 = vmul.f32 %v1058, %v1068
        %v1132 = vmul.f32 %v1061, %v1068
        %v1133 = vlaneseq
        %v1134 = vshrl.u32 %v1133, 7
        %v1135 = vsub.s32 1, %v1134
        %v1136 = vrot.slane %v1064, %v1135
        %v1137 = vadd.f32 %v1069, %v1136
        %v1138 = vadd.f32 %v1070, %v1136
        %v1139 = vadd.f32 %v1071, %v1136
        %v1140 = vadd.f32 %v1072, %v1136
        %v1141 = vadd.f32 %v1073, %v1136
        %v1142 = vadd.f32 %v1074, %v1136
        %v1143 = vadd.f32 %v1075, %v1136
        %v1144 = vadd.f32 %v1076, %v1136
        %v1145 = vadd.f32 %v1077, %v1136
        %v1146 = vadd.f32 %v1078, %v1136
        %v1147 = vadd.f32 %v1079, %v1136
        %v1148 = vadd.f32 %v1080, %v1136
        %v1149 = vadd.f32 %v1081, %v1136
        %v1150 = vadd.f32 %v1082, %v1136
        %v1151 = vadd.f32 %v1083, %v1136
        %v1152 = vadd.f32 %v1084, %v1136
        %v1153 = vadd.f32 %v1085, %v1136
        %v1154 = vadd.f32 %v1086, %v1136
        %v1155 = vadd.f32 %v1087, %v1136
        %v1156 = vadd.f32 %v1088, %v1136
        %v1157 = vadd.f32 %v1089, %v1136
        %v1158 = vadd.f32 %v1090, %v1136
        %v1159 = vadd.f32 %v1091, %v1136
        %v1160 = vadd.f32 %v1092, %v1136
        %v1161 = vadd.f32 %v1093, %v1136
        %v1162 = vadd.f32 %v1094, %v1136
        %v1163 = vadd.f32 %v1095, %v1136
        %v1164 = vadd.f32 %v1096, %v1136
        %v1165 = vadd.f32 %v1097, %v1136
        %v1166 = vadd.f32 %v1098, %v1136
        %v1167 = vadd.f32 %v1099, %v1136
        %v1168 = vadd.f32 %v1100, %v1136
        %v1169 = vadd.f32 %v1101, %v1136
        %v1170 = vadd.f32 %v1102, %v1136
        %v1171 = vadd.f32 %v1103, %v1136
        %v1172 = vadd.f32 %v1104, %v1136
        %v1173 = vadd.f32 %v1105, %v1136
        %v1174 = vadd.f32 %v1106, %v1136
        %v1175 = vadd.f32 %v1107, %v1136
        %v1176 = vadd.f32 %v1108, %v1136
        %v1177 = vadd.f32 %v1109, %v1136
        %v1178 = vadd.f32 %v1110, %v1136
        %v1179 = vadd.f32 %v1111, %v1136
        %v1180 = vadd.f32 %v1112, %v1136
        %v1181 = vadd.f32 %v1113, %v1136
        %v1182 = vadd.f32 %v1114, %v1136
        %v1183 = vadd.f32 %v1115, %v1136
        %v1184 = vadd.f32 %v1116, %v1136
        %v1185 = vadd.f32 %v1117, %v1136
        %v1186 = vadd.f32 %v1118, %v1136
        %v1187 = vadd.f32 %v1119, %v1136
        %v1188 = vadd.f32 %v1120, %v1136
        %v1189 = vadd.f32 %v1121, %v1136
        %v1190 = vadd.f32 %v1122, %v1136
        %v1191 = vadd.f32 %v1123, %v1136
        %v1192 = vadd.f32 %v1124, %v1136
        %v1193 = vadd.f32 %v1125, %v1136
        %v1194 = vadd.f32 %v1126, %v1136
        %v1195 = vadd.f32 %v1127, %v1136
        %v1196 = vadd.f32 %v1128, %v1136
        %v1197 = vadd.f32 %v1129, %v1136
        %v1198 = vadd.f32 %v1130, %v1136
        %v1199 = vadd.f32 %v1131, %v1136
        %v1200 = vadd.f32 %v1132, %v1136
        %v1201 = vmax.f32 %v1137, 0.0
        %v1202 = vmax.f32 %v1138, 0.0
        %v1203 = vmax.f32 %v1139, 0.0
        %v1204 = vmax.f32 %v1140, 0.0
        %v1205 = vmax.f32 %v1141, 0.0
        %v1206 = vmax.f32 %v1142, 0.0
        %v1207 = vmax.f32 %v1143, 0.0
        %v1208 = vmax.f32 %v1144, 0.0
        %v1209 = vmax.f32 %v1145, 0.0
        %v1210 = vmax.f32 %v1146, 0.0
        %v1211 = vmax.f32 %v1147, 0.0
        %v1212 = vmax.f32 %v1148, 0.0
        %v1213 = vmax.f32 %v1149, 0.0
        %v1214 = vmax.f32 %v1150, 0.0
        %v1215 = vmax.f32 %v1151, 0.0
        %v1216 = vmax.f32 %v1152, 0.0
        %v1217 = vmax.f32 %v1153, 0.0
        %v1218 = vmax.f32 %v1154, 0.0
        %v1219 = vmax.f32 %v1155, 0.0
        %v1220 = vmax.f32 %v1156, 0.0
        %v1221 = vmax.f32 %v1157, 0.0
        %v1222 = vmax.f32 %v1158, 0.0
        %v1223 = vmax.f32 %v1159, 0.0
        %v1224 = vmax.f32 %v1160, 0.0
        %v1225 = vmax.f32 %v1161, 0.0
        %v1226 = vmax.f32 %v1162, 0.0
        %v1227 = vmax.f32 %v1163, 0.0
        %v1228 = vmax.f32 %v1164, 0.0
        %v1229 = vmax.f32 %v1165, 0.0
        %v1230 = vmax.f32 %v1166, 0.0
        %v1231 = vmax.f32 %v1167, 0.0
        %v1232 = vmax.f32 %v1168, 0.0
        %v1233 = vmax.f32 %v1169, 0.0
        %v1234 = vmax.f32 %v1170, 0.0
        %v1235 = vmax.f32 %v1171, 0.0
        %v1236 = vmax.f32 %v1172, 0.0
        %v1237 = vmax.f32 %v1173, 0.0
        %v1238 = vmax.f32 %v1174, 0.0
        %v1239 = vmax.f32 %v1175, 0.0
        %v1240 = vmax.f32 %v1176, 0.0
        %v1241 = vmax.f32 %v1177, 0.0
        %v1242 = vmax.f32 %v1178, 0.0
        %v1243 = vmax.f32 %v1179, 0.0
        %v1244 = vmax.f32 %v1180, 0.0
        %v1245 = vmax.f32 %v1181, 0.0
        %v1246 = vmax.f32 %v1182, 0.0
        %v1247 = vmax.f32 %v1183, 0.0
        %v1248 = vmax.f32 %v1184, 0.0
        %v1249 = vmax.f32 %v1185, 0.0
        %v1250 = vmax.f32 %v1186, 0.0
        %v1251 = vmax.f32 %v1187, 0.0
        %v1252 = vmax.f32 %v1188, 0.0
        %v1253 = vmax.f32 %v1189, 0.0
        %v1254 = vmax.f32 %v1190, 0.0
        %v1255 = vmax.f32 %v1191, 0.0
        %v1256 = vmax.f32 %v1192, 0.0
        %v1257 = vmax.f32 %v1193, 0.0
        %v1258 = vmax.f32 %v1194, 0.0
        %v1259 = vmax.f32 %v1195, 0.0
        %v1260 = vmax.f32 %v1196, 0.0
        %v1261 = vmax.f32 %v1197, 0.0
        %v1262 = vmax.f32 %v1198, 0.0
        %v1263 = vmax.f32 %v1199, 0.0
        %v1264 = vmax.f32 %v1200, 0.0
        %v1265 = vpack.c.bf16 %v1202, %v1201
        %v1266 = vpack.c.bf16 %v1204, %v1203
        %v1267 = vpack.c.bf16 %v1206, %v1205
        %v1268 = vpack.c.bf16 %v1208, %v1207
        %v1269 = vpack.c.bf16 %v1210, %v1209
        %v1270 = vpack.c.bf16 %v1212, %v1211
        %v1271 = vpack.c.bf16 %v1214, %v1213
        %v1272 = vpack.c.bf16 %v1216, %v1215
        %v1273 = vpack.c.bf16 %v1218, %v1217
        %v1274 = vpack.c.bf16 %v1220, %v1219
        %v1275 = vpack.c.bf16 %v1222, %v1221
        %v1276 = vpack.c.bf16 %v1224, %v1223
        %v1277 = vpack.c.bf16 %v1226, %v1225
        %v1278 = vpack.c.bf16 %v1228, %v1227
        %v1279 = vpack.c.bf16 %v1230, %v1229
        %v1280 = vpack.c.bf16 %v1232, %v1231
        %v1281 = vpack.c.bf16 %v1234, %v1233
        %v1282 = vpack.c.bf16 %v1236, %v1235
        %v1283 = vpack.c.bf16 %v1238, %v1237
        %v1284 = vpack.c.bf16 %v1240, %v1239
        %v1285 = vpack.c.bf16 %v1242, %v1241
        %v1286 = vpack.c.bf16 %v1244, %v1243
        %v1287 = vpack.c.bf16 %v1246, %v1245
        %v1288 = vpack.c.bf16 %v1248, %v1247
        %v1289 = vpack.c.bf16 %v1250, %v1249
        %v1290 = vpack.c.bf16 %v1252, %v1251
        %v1291 = vpack.c.bf16 %v1254, %v1253
        %v1292 = vpack.c.bf16 %v1256, %v1255
        %v1293 = vpack.c.bf16 %v1258, %v1257
        %v1294 = vpack.c.bf16 %v1260, %v1259
        %v1295 = vpack.c.bf16 %v1262, %v1261
        %v1296 = vpack.c.bf16 %v1264, %v1263
        %v1329 = vunpack.c.l.b16 %v1265
        %v1330 = vunpack.c.h.b16 %v1265
        %v1331 = vunpack.c.l.b16 %v1266
        %v1332 = vunpack.c.h.b16 %v1266
        %v1333 = vunpack.c.l.b16 %v1267
        %v1334 = vunpack.c.h.b16 %v1267
        %v1335 = vunpack.c.l.b16 %v1268
        %v1336 = vunpack.c.h.b16 %v1268
        %v1337 = vunpack.c.l.b16 %v1269
        %v1338 = vunpack.c.h.b16 %v1269
        %v1339 = vunpack.c.l.b16 %v1270
        %v1340 = vunpack.c.h.b16 %v1270
        %v1341 = vunpack.c.l.b16 %v1271
        %v1342 = vunpack.c.h.b16 %v1271
        %v1343 = vunpack.c.l.b16 %v1272
        %v1344 = vunpack.c.h.b16 %v1272
        %v1345 = vunpack.c.l.b16 %v1273
        %v1346 = vunpack.c.h.b16 %v1273
        %v1347 = vunpack.c.l.b16 %v1274
        %v1348 = vunpack.c.h.b16 %v1274
        %v1349 = vunpack.c.l.b16 %v1275
        %v1350 = vunpack.c.h.b16 %v1275
        %v1351 = vunpack.c.l.b16 %v1276
        %v1352 = vunpack.c.h.b16 %v1276
        %v1353 = vunpack.c.l.b16 %v1277
        %v1354 = vunpack.c.h.b16 %v1277
        %v1355 = vunpack.c.l.b16 %v1278
        %v1356 = vunpack.c.h.b16 %v1278
        %v1357 = vunpack.c.l.b16 %v1279
        %v1358 = vunpack.c.h.b16 %v1279
        %v1359 = vunpack.c.l.b16 %v1280
        %v1360 = vunpack.c.h.b16 %v1280
        %v1361 = vunpack.c.l.b16 %v1281
        %v1362 = vunpack.c.h.b16 %v1281
        %v1363 = vunpack.c.l.b16 %v1282
        %v1364 = vunpack.c.h.b16 %v1282
        %v1365 = vunpack.c.l.b16 %v1283
        %v1366 = vunpack.c.h.b16 %v1283
        %v1367 = vunpack.c.l.b16 %v1284
        %v1368 = vunpack.c.h.b16 %v1284
        %v1369 = vunpack.c.l.b16 %v1285
        %v1370 = vunpack.c.h.b16 %v1285
        %v1371 = vunpack.c.l.b16 %v1286
        %v1372 = vunpack.c.h.b16 %v1286
        %v1373 = vunpack.c.l.b16 %v1287
        %v1374 = vunpack.c.h.b16 %v1287
        %v1375 = vunpack.c.l.b16 %v1288
        %v1376 = vunpack.c.h.b16 %v1288
        %v1377 = vunpack.c.l.b16 %v1289
        %v1378 = vunpack.c.h.b16 %v1289
        %v1379 = vunpack.c.l.b16 %v1290
        %v1380 = vunpack.c.h.b16 %v1290
        %v1381 = vunpack.c.l.b16 %v1291
        %v1382 = vunpack.c.h.b16 %v1291
        %v1383 = vunpack.c.l.b16 %v1292
        %v1384 = vunpack.c.h.b16 %v1292
        %v1385 = vunpack.c.l.b16 %v1293
        %v1386 = vunpack.c.h.b16 %v1293
        %v1387 = vunpack.c.l.b16 %v1294
        %v1388 = vunpack.c.h.b16 %v1294
        %v1389 = vunpack.c.l.b16 %v1295
        %v1390 = vunpack.c.h.b16 %v1295
        %v1391 = vunpack.c.l.b16 %v1296
        %v1392 = vunpack.c.h.b16 %v1296
        %v1393 = vpack.c.b16 %v1329, %v1329
        %v1394 = vpack.c.b16 %v1330, %v1330
        %v1395 = vpack.c.b16 %v1331, %v1331
        %v1396 = vpack.c.b16 %v1332, %v1332
        %v1397 = vpack.c.b16 %v1333, %v1333
        %v1398 = vpack.c.b16 %v1334, %v1334
        %v1399 = vpack.c.b16 %v1335, %v1335
        %v1400 = vpack.c.b16 %v1336, %v1336
        %v1401 = vpack.c.b16 %v1337, %v1337
        %v1402 = vpack.c.b16 %v1338, %v1338
        %v1403 = vpack.c.b16 %v1339, %v1339
        %v1404 = vpack.c.b16 %v1340, %v1340
        %v1405 = vpack.c.b16 %v1341, %v1341
        %v1406 = vpack.c.b16 %v1342, %v1342
        %v1407 = vpack.c.b16 %v1343, %v1343
        %v1408 = vpack.c.b16 %v1344, %v1344
        %v1409 = vpack.c.b16 %v1345, %v1345
        %v1410 = vpack.c.b16 %v1346, %v1346
        %v1411 = vpack.c.b16 %v1347, %v1347
        %v1412 = vpack.c.b16 %v1348, %v1348
        %v1413 = vpack.c.b16 %v1349, %v1349
        %v1414 = vpack.c.b16 %v1350, %v1350
        %v1415 = vpack.c.b16 %v1351, %v1351
        %v1416 = vpack.c.b16 %v1352, %v1352
        %v1417 = vpack.c.b16 %v1353, %v1353
        %v1418 = vpack.c.b16 %v1354, %v1354
        %v1419 = vpack.c.b16 %v1355, %v1355
        %v1420 = vpack.c.b16 %v1356, %v1356
        %v1421 = vpack.c.b16 %v1357, %v1357
        %v1422 = vpack.c.b16 %v1358, %v1358
        %v1423 = vpack.c.b16 %v1359, %v1359
        %v1424 = vpack.c.b16 %v1360, %v1360
        %v1425 = vpack.c.b16 %v1361, %v1361
        %v1426 = vpack.c.b16 %v1362, %v1362
        %v1427 = vpack.c.b16 %v1363, %v1363
        %v1428 = vpack.c.b16 %v1364, %v1364
        %v1429 = vpack.c.b16 %v1365, %v1365
        %v1430 = vpack.c.b16 %v1366, %v1366
        %v1431 = vpack.c.b16 %v1367, %v1367
        %v1432 = vpack.c.b16 %v1368, %v1368
        %v1433 = vpack.c.b16 %v1369, %v1369
        %v1434 = vpack.c.b16 %v1370, %v1370
        %v1435 = vpack.c.b16 %v1371, %v1371
        %v1436 = vpack.c.b16 %v1372, %v1372
        %v1437 = vpack.c.b16 %v1373, %v1373
        %v1438 = vpack.c.b16 %v1374, %v1374
        %v1439 = vpack.c.b16 %v1375, %v1375
        %v1440 = vpack.c.b16 %v1376, %v1376
        %v1441 = vpack.c.b16 %v1377, %v1377
        %v1442 = vpack.c.b16 %v1378, %v1378
        %v1443 = vpack.c.b16 %v1379, %v1379
        %v1444 = vpack.c.b16 %v1380, %v1380
        %v1445 = vpack.c.b16 %v1381, %v1381
        %v1446 = vpack.c.b16 %v1382, %v1382
        %v1447 = vpack.c.b16 %v1383, %v1383
        %v1448 = vpack.c.b16 %v1384, %v1384
        %v1449 = vpack.c.b16 %v1385, %v1385
        %v1450 = vpack.c.b16 %v1386, %v1386
        %v1451 = vpack.c.b16 %v1387, %v1387
        %v1452 = vpack.c.b16 %v1388, %v1388
        %v1453 = vpack.c.b16 %v1389, %v1389
        %v1454 = vpack.c.b16 %v1390, %v1390
        %v1455 = vpack.c.b16 %v1391, %v1391
        %v1456 = vpack.c.b16 %v1392, %v1392
        %1521 = vst [vmem:[%s253] sm:$0xf] %v1393
        %1522 = vst [vmem:[%s253 + $0x4] sm:$0xf] %v1394
        %1523 = vst [vmem:[%s253 + $0x8] sm:$0xf] %v1395
        %1524 = vst [vmem:[%s253 + $0xc] sm:$0xf] %v1396
        %1525 = vst [vmem:[%s253 + $0x10] sm:$0xf] %v1397
        %1526 = vst [vmem:[%s253 + $0x14] sm:$0xf] %v1398
        %1527 = vst [vmem:[%s253 + $0x18] sm:$0xf] %v1399
        %1528 = vst [vmem:[%s253 + $0x1c] sm:$0xf] %v1400
        %1529 = vst [vmem:[%s253 + $0x20] sm:$0xf] %v1401
        %1530 = vst [vmem:[%s253 + $0x24] sm:$0xf] %v1402
        %1531 = vst [vmem:[%s253 + $0x28] sm:$0xf] %v1403
        %1532 = vst [vmem:[%s253 + $0x2c] sm:$0xf] %v1404
        %1533 = vst [vmem:[%s253 + $0x30] sm:$0xf] %v1405
        %1534 = vst [vmem:[%s253 + $0x34] sm:$0xf] %v1406
        %1535 = vst [vmem:[%s253 + $0x38] sm:$0xf] %v1407
        %1536 = vst [vmem:[%s253 + $0x3c] sm:$0xf] %v1408
        %1537 = vst [vmem:[%s253 + $0x40] sm:$0xf] %v1409
        %1538 = vst [vmem:[%s253 + $0x44] sm:$0xf] %v1410
        %1539 = vst [vmem:[%s253 + $0x48] sm:$0xf] %v1411
        %1540 = vst [vmem:[%s253 + $0x4c] sm:$0xf] %v1412
        %1541 = vst [vmem:[%s253 + $0x50] sm:$0xf] %v1413
        %1542 = vst [vmem:[%s253 + $0x54] sm:$0xf] %v1414
        %1543 = vst [vmem:[%s253 + $0x58] sm:$0xf] %v1415
        %1544 = vst [vmem:[%s253 + $0x5c] sm:$0xf] %v1416
        %1545 = vst [vmem:[%s253 + $0x60] sm:$0xf] %v1417
        %1546 = vst [vmem:[%s253 + $0x64] sm:$0xf] %v1418
        %1547 = vst [vmem:[%s253 + $0x68] sm:$0xf] %v1419
        %1548 = vst [vmem:[%s253 + $0x6c] sm:$0xf] %v1420
        %1549 = vst [vmem:[%s253 + $0x70] sm:$0xf] %v1421
        %1550 = vst [vmem:[%s253 + $0x74] sm:$0xf] %v1422
        %1551 = vst [vmem:[%s253 + $0x78] sm:$0xf] %v1423
        %1552 = vst [vmem:[%s253 + $0x7c] sm:$0xf] %v1424
        %1553 = vst [vmem:[%s253 + $0x80] sm:$0xf] %v1425
        %1554 = vst [vmem:[%s253 + $0x84] sm:$0xf] %v1426
        %1555 = vst [vmem:[%s253 + $0x88] sm:$0xf] %v1427
        %1556 = vst [vmem:[%s253 + $0x8c] sm:$0xf] %v1428
        %1557 = vst [vmem:[%s253 + $0x90] sm:$0xf] %v1429
        %1558 = vst [vmem:[%s253 + $0x94] sm:$0xf] %v1430
        %1559 = vst [vmem:[%s253 + $0x98] sm:$0xf] %v1431
        %1560 = vst [vmem:[%s253 + $0x9c] sm:$0xf] %v1432
        %1561 = vst [vmem:[%s253 + $0xa0] sm:$0xf] %v1433
        %1562 = vst [vmem:[%s253 + $0xa4] sm:$0xf] %v1434
        %1563 = vst [vmem:[%s253 + $0xa8] sm:$0xf] %v1435
        %1564 = vst [vmem:[%s253 + $0xac] sm:$0xf] %v1436
        %1565 = vst [vmem:[%s253 + $0xb0] sm:$0xf] %v1437
        %1566 = vst [vmem:[%s253 + $0xb4] sm:$0xf] %v1438
        %1567 = vst [vmem:[%s253 + $0xb8] sm:$0xf] %v1439
        %1568 = vst [vmem:[%s253 + $0xbc] sm:$0xf] %v1440
        %1569 = vst [vmem:[%s253 + $0xc0] sm:$0xf] %v1441
        %1570 = vst [vmem:[%s253 + $0xc4] sm:$0xf] %v1442
        %1571 = vst [vmem:[%s253 + $0xc8] sm:$0xf] %v1443
        %1572 = vst [vmem:[%s253 + $0xcc] sm:$0xf] %v1444
        %1573 = vst [vmem:[%s253 + $0xd0] sm:$0xf] %v1445
        %1574 = vst [vmem:[%s253 + $0xd4] sm:$0xf] %v1446
        %1575 = vst [vmem:[%s253 + $0xd8] sm:$0xf] %v1447
        %1576 = vst [vmem:[%s253 + $0xdc] sm:$0xf] %v1448
        %1577 = vst [vmem:[%s253 + $0xe0] sm:$0xf] %v1449
        %1578 = vst [vmem:[%s253 + $0xe4] sm:$0xf] %v1450
        %1579 = vst [vmem:[%s253 + $0xe8] sm:$0xf] %v1451
        %1580 = vst [vmem:[%s253 + $0xec] sm:$0xf] %v1452
        %1581 = vst [vmem:[%s253 + $0xf0] sm:$0xf] %v1453
        %1582 = vst [vmem:[%s253 + $0xf4] sm:$0xf] %v1454
        %1583 = vst [vmem:[%s253 + $0xf8] sm:$0xf] %v1455
        %1584 = vst [vmem:[%s253 + $0xfc] sm:$0xf] %v1456
        %s1585 = sand.u32 %s132, 1
        %s1586 = scalar_lea.sflag [#allocation4], %s1585
        %s1587 = sand.u32 %s132, 1
        %s1588 = smul.addr %s1587, 256
        %s1589 = scalar_lea.vmem [#allocation7], %s1588
        // Predicated region
        $region41: #{tpu_custom_call.1} parent=31 // pred_check
          %p1590 = pneg %p142
        $region42: #{tpu_custom_call.1} parent=31 // pred_check_branch
          %1592 = sbr.rel (%p1590) target = $region44
        $region43: #{tpu_custom_call.1} parent=31 // pred_region
          %s1593 = smul.u32 64, %s26
          %s1595 = ssub.s32 4096, 4096
          %1596 = vsyncadd %s1586, %s1595
          %s1597 = sadd.s32 %s27, %s1593
          %s1598 = smul.addr %s1597, 64
          %s1599 = scalar_lea.hbm %s3, %s1598
          %s1600 = sshll.u32 %s1589, 4
          %s1601 = int_to_ptr.vmem [resolvable:$true] %s1600
          %1606 = dma.vmem_to_hbm [thread:$0]  %s1601, 4096, %s1599, %s1586, 64, 64, 4
        $region44: #{tpu_custom_call.1} parent=31 // pred_fallthru
          _
      $region32: #{tpu_custom_call.1} parent=5 // pred_fallthru
        _
      %p1607 = scmp.le.s32.totalorder 2, %s16
      // Predicated region
      $region45: #{tpu_custom_call.1} parent=5 // pred_check
        %p1608 = pneg %p1607
      $region46: #{tpu_custom_call.1} parent=5 // pred_check_branch
        %1610 = sbr.rel (%p1608) target = $region48
      $region47: #{tpu_custom_call.1} parent=5 // pred_region
        %s1611 = ssub.s32 %s16, 2
        // Predicated region
        $region49: #{tpu_custom_call.1} parent=47 // pred_check
          %p1612 = pneg %p148
        $region50: #{tpu_custom_call.1} parent=47 // pred_check_branch
          %1614 = sbr.rel (%p1612) target = $region52
        $region51: #{tpu_custom_call.1} parent=47 // pred_region
          %s1615 = sand.u32 %s133, 1
          %s1616 = scalar_lea.sflag [#allocation4], %s1615
          %s1617 = sand.u32 %s133, 1
          %s1618 = smul.addr %s1617, 256
          %s1619 = scalar_lea.vmem [#allocation7], %s1618
          %1620 = dma.done %s1616, 4096
        $region52: #{tpu_custom_call.1} parent=47 // pred_fallthru
          _
      $region48: #{tpu_custom_call.1} parent=5 // pred_fallthru
        _
    $region6: #{tpu_custom_call.1} parent=1 // loop_footer
      %s20 = sadd.s32 1, %s16
    $region7: #{tpu_custom_call.1} parent=1 // loop_footer_branch
      %15 = sbr.rel target = $region3
    $region8: #{tpu_custom_call.1} parent=1 // loop_exit
      _
    %1621 = vsyncpa [#allocation3], 1
    %s1622 = scalar_lea.sflag [#allocation3], 1
    %1623 = vsyncpa %s1622, 1
    %1624 = vsyncpa [#allocation6], 1
    %1625 = vsyncpa [#allocation4], 1
    %s1626 = scalar_lea.sflag [#allocation4], 1
    %1627 = vsyncpa %s1626, 1

</llo_original>
